<compile_context>
chip_gen: v7x
topology: tpu7x:2x2x1
jax: 0.10.0
libtpu: 0.0.40
codegen_flags: <defaults>
</compile_context>

<pallas_src>
import jax
import jax.numpy as jnp
from jax.experimental import pallas as pl
from jax.experimental.pallas import tpu as pltpu


def _round_up(x, m):
    return ((x + m - 1) // m) * m


def _ffn_kernel(x_ref, w1_ref, b1_ref, w2_ref, b2_ref, o_ref, acc_ref):
    # x_ref:  (tm, d_model)        bf16 tile of token rows
    # w1_ref: (d_model, tk)        bf16 chunk of W1 columns
    # b1_ref: (1, tk)              f32 chunk of b1
    # w2_ref: (tk, d_model)        bf16 chunk of W2 rows
    # b2_ref: (1, d_model)         f32
    # o_ref:  (tm, d_model)        output tile (input dtype)
    # acc_ref:(tm, d_model)        f32 accumulator scratch
    k = pl.program_id(1)

    @pl.when(k == 0)
    def _():
        acc_ref[...] = jnp.zeros_like(acc_ref)

    # First matmul chunk + bias + ReLU (elementwise in d_ff -> chunking is exact).
    h = jnp.dot(x_ref[...], w1_ref[...], preferred_element_type=jnp.float32)
    h = h + b1_ref[...]
    h = jnp.maximum(h, 0.0)

    # Second matmul chunk, accumulated over the d_ff grid axis in f32.
    acc_ref[...] += jnp.dot(h.astype(w2_ref.dtype), w2_ref[...],
                            preferred_element_type=jnp.float32)

    @pl.when(k == pl.num_programs(1) - 1)
    def _():
        o_ref[...] = (acc_ref[...] + b2_ref[...]).astype(o_ref.dtype)


def positionwise_feed_forward(x, w1, b1, w2, b2, *, tm=256, tk=512,
                              compute_dtype=jnp.bfloat16):
    """x: (batch, seq, d_model); w1: (d_model, d_ff); w2: (d_ff, d_model)."""
    batch, seq, d_model = x.shape
    d_ff = w1.shape[1]
    M = batch * seq
    out_dtype = x.dtype

    # Row tile: large for MXU utilization, but no larger than (padded) M.
    tm_eff = min(tm, _round_up(M, 16))
    M_pad = _round_up(M, tm_eff)

    # d_ff chunk: multiple of 128 lanes; pad d_ff so it divides evenly.
    tk_eff = min(tk, _round_up(d_ff, 128))
    dff_pad = _round_up(d_ff, tk_eff)

    # --- prepare (padded, compute-dtype) operands -------------------------
    x2d = x.reshape(M, d_model).astype(compute_dtype)
    if M_pad != M:
        x2d = jnp.pad(x2d, ((0, M_pad - M), (0, 0)))

    w1_c = w1.astype(compute_dtype)
    w2_c = w2.astype(compute_dtype)
    b1_2d = b1.reshape(1, d_ff).astype(jnp.float32)
    if dff_pad != d_ff:
        w1_c = jnp.pad(w1_c, ((0, 0), (0, dff_pad - d_ff)))
        w2_c = jnp.pad(w2_c, ((0, dff_pad - d_ff), (0, 0)))
        b1_2d = jnp.pad(b1_2d, ((0, 0), (0, dff_pad - d_ff)))
    b2_2d = b2.reshape(1, d_model).astype(jnp.float32)

    grid = (M_pad // tm_eff, dff_pad // tk_eff)

    itemsize = jnp.dtype(compute_dtype).itemsize
    cost = pl.CostEstimate(
        flops=4 * M * d_model * d_ff,
        transcendentals=0,
        bytes_accessed=(x2d.size * itemsize + w1_c.size * itemsize
                        + w2_c.size * itemsize + b1_2d.size * 4 + b2_2d.size * 4
                        + M_pad * d_model * jnp.dtype(out_dtype).itemsize),
    )

    out2d = pl.pallas_call(
        _ffn_kernel,
        out_shape=jax.ShapeDtypeStruct((M_pad, d_model), out_dtype),
        grid_spec=pltpu.PrefetchScalarGridSpec(
            num_scalar_prefetch=0,
            grid=grid,
            in_specs=[
                pl.BlockSpec((tm_eff, d_model), lambda i, k: (i, 0)),   # x tile
                pl.BlockSpec((d_model, tk_eff), lambda i, k: (0, k)),   # W1 chunk
                pl.BlockSpec((1, tk_eff), lambda i, k: (0, k)),         # b1 chunk
                pl.BlockSpec((tk_eff, d_model), lambda i, k: (k, 0)),   # W2 chunk
                pl.BlockSpec((1, d_model), lambda i, k: (0, 0)),        # b2
            ],
            out_specs=pl.BlockSpec((tm_eff, d_model), lambda i, k: (i, 0)),
            scratch_shapes=[pltpu.VMEM((tm_eff, d_model), jnp.float32)],
        ),
        compiler_params=pltpu.CompilerParams(
            dimension_semantics=("parallel", "arbitrary"),
            vmem_limit_bytes=48 * 1024 * 1024,
        ),
        cost_estimate=cost,
    )(x2d, w1_c, b1_2d, w2_c, b2_2d)

    return out2d[:M].reshape(batch, seq, d_model)


if __name__ == "__main__":
    # Shapes from the module spec: d_model=512, d_ff=2048; small batch/seq.
    batch, seq = 2, 8
    d_model, d_ff = 512, 2048

    key = jax.random.PRNGKey(0)
    kx, k1, kb1, k2, kb2 = jax.random.split(key, 5)

    x = jax.random.normal(kx, (batch, seq, d_model), dtype=jnp.float32)
    # Deterministic synthetic parameters (not a checkpoint load).
    w1 = jax.random.normal(k1, (d_model, d_ff), dtype=jnp.float32) * 0.02
    b1 = jax.random.normal(kb1, (d_ff,), dtype=jnp.float32) * 0.02
    w2 = jax.random.normal(k2, (d_ff, d_model), dtype=jnp.float32) * 0.02
    b2 = jax.random.normal(kb2, (d_model,), dtype=jnp.float32) * 0.02

    out = positionwise_feed_forward(x, w1, b1, w2, b2)
    out = jax.block_until_ready(out)

    # Pure-JAX f32 reference of the same forward semantics. The kernel runs
    # its matmuls in bf16 with f32 accumulation, so use a bf16-level tolerance.
    ref = jnp.maximum(x @ w1 + b1, 0.0) @ w2 + b2
    assert out.shape == (batch, seq, d_model)
    assert jnp.allclose(out, ref, atol=5e-2, rtol=5e-2), (
        float(jnp.max(jnp.abs(out - ref))))

    print("KERNEL_OK")
</pallas_src>

<mosaic_0001>
module attributes {stable_mosaic.version = 11 : i64} {
  func.func @_ffn_kernel(%arg0: i32, %arg1: i32, %arg2: memref<16x512xbf16, #tpu.memory_space<vmem>>, %arg3: memref<512x512xbf16, #tpu.memory_space<vmem>>, %arg4: memref<1x512xf32, #tpu.memory_space<vmem>>, %arg5: memref<512x512xbf16, #tpu.memory_space<vmem>>, %arg6: memref<1x512xf32, #tpu.memory_space<vmem>>, %arg7: memref<16x512xf32, #tpu.memory_space<vmem>>, %arg8: memref<16x512xf32, #tpu.memory_space<vmem>>) attributes {dimension_semantics = [#tpu.dimension_semantics<parallel>, #tpu.dimension_semantics<arbitrary>], iteration_bounds = array<i64: 1, 4>, scalar_prefetch = 0 : i64, scratch_operands = 1 : i64, tpu.core_type = #tpu.core_type<tc>, window_params = [{transform_indices = @transform_0, window_bounds = array<i64: 16, 512>}, {transform_indices = @transform_1, window_bounds = array<i64: 512, 512>}, {transform_indices = @transform_2, window_bounds = array<i64: 1, 512>}, {transform_indices = @transform_3, window_bounds = array<i64: 512, 512>}, {pipeline_mode = #tpu.pipeline_mode<synchronous>, transform_indices = @transform_4, window_bounds = array<i64: 1, 512>}, {transform_indices = @transform_5, window_bounds = array<i64: 16, 512>}]} {
    %c0_i32 = arith.constant 0 : i32
    %0 = arith.cmpi eq, %arg1, %c0_i32 : i32
    %1 = arith.extui %0 : i1 to i32
    %c0_i32_0 = arith.constant 0 : i32
    %2 = arith.cmpi ne, %1, %c0_i32_0 : i32
    scf.if %2 {
      %cst_15 = arith.constant 0.000000e+00 : f32
      %20 = vector.broadcast %cst_15 : f32 to vector<16x512xf32>
      %c0_16 = arith.constant 0 : index
      %c0_17 = arith.constant 0 : index
      %21 = vector.load %arg8[%c0_16, %c0_17] : memref<16x512xf32, #tpu.memory_space<vmem>>, vector<16x512xf32>
      tpu.vector_store %arg8[%c0_16, %c0_17], %20 {strides = array<i32>} : memref<16x512xf32, #tpu.memory_space<vmem>>, vector<16x512xf32>,
    } else {
    }
    %c0 = arith.constant 0 : index
    %c0_1 = arith.constant 0 : index
    %3 = vector.load %arg2[%c0, %c0_1] : memref<16x512xbf16, #tpu.memory_space<vmem>>, vector<16x512xbf16>
    %c0_2 = arith.constant 0 : index
    %c0_3 = arith.constant 0 : index
    %4 = vector.load %arg3[%c0_2, %c0_3] : memref<512x512xbf16, #tpu.memory_space<vmem>>, vector<512x512xbf16>
    %cst = arith.constant dense<0.000000e+00> : vector<16x512xf32>
    %5 = tpu.matmul %3, %4, %cst {dimension_numbers = #tpu.dot_dimension_numbers<[1], [0], [0], [1], [0, 0, 1, 1], [], []>} : vector<16x512xbf16>, vector<512x512xbf16>, vector<16x512xf32> -> vector<16x512xf32>
    %c0_4 = arith.constant 0 : index
    %c0_5 = arith.constant 0 : index
    %6 = vector.load %arg4[%c0_4, %c0_5] : memref<1x512xf32, #tpu.memory_space<vmem>>, vector<1x512xf32>
    %7 = vector.broadcast %6 : vector<1x512xf32> to vector<16x512xf32>
    %8 = arith.addf %5, %7 : vector<16x512xf32>
    %cst_6 = arith.constant 0.000000e+00 : f32
    %9 = vector.broadcast %cst_6 : f32 to vector<16x512xf32>
    %10 = arith.maximumf %8, %9 : vector<16x512xf32>
    %c0_7 = arith.constant 0 : index
    %c0_8 = arith.constant 0 : index
    %11 = vector.load %arg8[%c0_7, %c0_8] : memref<16x512xf32, #tpu.memory_space<vmem>>, vector<16x512xf32>
    %12 = arith.truncf %10 : vector<16x512xf32> to vector<16x512xbf16>
    %c0_9 = arith.constant 0 : index
    %c0_10 = arith.constant 0 : index
    %13 = vector.load %arg5[%c0_9, %c0_10] : memref<512x512xbf16, #tpu.memory_space<vmem>>, vector<512x512xbf16>
    %cst_11 = arith.constant dense<0.000000e+00> : vector<16x512xf32>
    %14 = tpu.matmul %12, %13, %cst_11 {dimension_numbers = #tpu.dot_dimension_numbers<[1], [0], [0], [1], [0, 0, 1, 1], [], []>} : vector<16x512xbf16>, vector<512x512xbf16>, vector<16x512xf32> -> vector<16x512xf32>
    %15 = arith.addf %11, %14 : vector<16x512xf32>
    %c0_12 = arith.constant 0 : index
    %c0_13 = arith.constant 0 : index
    %16 = vector.load %arg8[%c0_12, %c0_13] : memref<16x512xf32, #tpu.memory_space<vmem>>, vector<16x512xf32>
    tpu.vector_store %arg8[%c0_12, %c0_13], %15 {strides = array<i32>} : memref<16x512xf32, #tpu.memory_space<vmem>>, vector<16x512xf32>,
    %c3_i32 = arith.constant 3 : i32
    %17 = arith.cmpi eq, %arg1, %c3_i32 : i32
    %18 = arith.extui %17 : i1 to i32
    %c0_i32_14 = arith.constant 0 : i32
    %19 = arith.cmpi ne, %18, %c0_i32_14 : i32
    scf.if %19 {
      %c0_15 = arith.constant 0 : index
      %c0_16 = arith.constant 0 : index
      %20 = vector.load %arg8[%c0_15, %c0_16] : memref<16x512xf32, #tpu.memory_space<vmem>>, vector<16x512xf32>
      %c0_17 = arith.constant 0 : index
      %c0_18 = arith.constant 0 : index
      %21 = vector.load %arg6[%c0_17, %c0_18] : memref<1x512xf32, #tpu.memory_space<vmem>>, vector<1x512xf32>
      %22 = vector.broadcast %21 : vector<1x512xf32> to vector<16x512xf32>
      %23 = arith.addf %20, %22 : vector<16x512xf32>
      %c0_19 = arith.constant 0 : index
      %c0_20 = arith.constant 0 : index
      %24 = vector.load %arg7[%c0_19, %c0_20] : memref<16x512xf32, #tpu.memory_space<vmem>>, vector<16x512xf32>
      tpu.vector_store %arg7[%c0_19, %c0_20], %23 {strides = array<i32>} : memref<16x512xf32, #tpu.memory_space<vmem>>, vector<16x512xf32>,
    } else {
    }
    return
  }
  func.func @transform_0(%arg0: i32, %arg1: i32) -> (i32, i32) {
    %c0_i32 = arith.constant 0 : i32
    %c0_i32_0 = arith.constant 0 : i32
    return %arg0, %c0_i32 : i32, i32
  }
  func.func @transform_1(%arg0: i32, %arg1: i32) -> (i32, i32) {
    %c0_i32 = arith.constant 0 : i32
    %c0_i32_0 = arith.constant 0 : i32
    return %c0_i32, %arg1 : i32, i32
  }
  func.func @transform_2(%arg0: i32, %arg1: i32) -> (i32, i32) {
    %c0_i32 = arith.constant 0 : i32
    %c0_i32_0 = arith.constant 0 : i32
    return %c0_i32, %arg1 : i32, i32
  }
  func.func @transform_3(%arg0: i32, %arg1: i32) -> (i32, i32) {
    %c0_i32 = arith.constant 0 : i32
    %c0_i32_0 = arith.constant 0 : i32
    return %arg1, %c0_i32 : i32, i32
  }
  func.func @transform_4(%arg0: i32, %arg1: i32) -> (i32, i32) {
    %c0_i32 = arith.constant 0 : i32
    %c0_i32_0 = arith.constant 0 : i32
    %c0_i32_1 = arith.constant 0 : i32
    return %c0_i32, %c0_i32_0 : i32, i32
  }
  func.func @transform_5(%arg0: i32, %arg1: i32) -> (i32, i32) {
    %c0_i32 = arith.constant 0 : i32
    %c0_i32_0 = arith.constant 0 : i32
    return %arg0, %c0_i32 : i32, i32
  }
}

</mosaic_0001>

<llo_original>
// kernel: tpu_custom_call.1
$region0: #{tpu_custom_call.1}
  #allocation0 [shape = 'u32[]', space=smem, size = 0x4, offset = 0x4, fixed_abs, tag = 'smem constant byte address 0x4 - core index']
  #allocation1 [shape = 'u32[144,128]{1,0:T(1,128)}', space=vmem, size = 0x12000, scoped, tag = 'internal scratch']
  #allocation2 [shape = 'f32[16,512]{1,0:T(8,128)}', space=vmem, size = 0x8000, scoped, tag = 'scratch operand']
  %s0 = inlined_call_operand.hbm [shape: bf16[16,512], index: 0, kind: input, shape index: {}]
  %s1 = inlined_call_operand.hbm [shape: bf16[512,2048], index: 1, kind: input, shape index: {}]
  %s2 = inlined_call_operand.hbm [shape: f32[1,2048], index: 2, kind: input, shape index: {}]
  %s3 = inlined_call_operand.hbm [shape: bf16[2048,512], index: 3, kind: input, shape index: {}]
  %s4 = inlined_call_operand.hbm [shape: f32[1,512], index: 4, kind: input, shape index: {}]
  %s5 = inlined_call_operand.hbm [shape: f32[16,512], index: 5, kind: output, shape index: {}]
  %s6 = sld [smem:[#allocation0]]
  $region81: #{tpu_custom_call.1} parent=0
    _
  %s8 = ssub.s32 1, %s6
  %s9 = scalar_select 0, %s8, %s6
  $region1: #{tpu_custom_call.1} parent=0
    #allocation3 [shape = 'u8[16384]{0}', space=vmem, size = 0x4000, scoped, tag = 'input window, operand 0, single buffered']
    #allocation4 [shape = 's32[2]{0}', space=sflag, size = 0x8, scoped, tag = 'scoped memory for tpu_custom_call.1']
    #allocation5 [shape = 's32[2]{0}', space=sflag, size = 0x8, scoped, tag = 'scoped memory for tpu_custom_call.1']
    #allocation6 [shape = 'u8[1048576]{0}', space=vmem, size = 0x100000, scoped, tag = 'input window, operand 1']
    #allocation7 [shape = 's32[2]{0}', space=sflag, size = 0x8, scoped, tag = 'scoped memory for tpu_custom_call.1']
    #allocation8 [shape = 'u8[4096]{0}', space=vmem, size = 0x1000, scoped, tag = 'input window, operand 2']
    #allocation9 [shape = 'u8[1048576]{0}', space=vmem, size = 0x100000, scoped, tag = 'input window, operand 3']
    #allocation10 [shape = 's32[2]{0}', space=sflag, size = 0x8, scoped, tag = 'scoped memory for tpu_custom_call.1']
    #allocation11 [shape = 'u8[2048]{0}', space=vmem, size = 0x800, scoped, tag = 'input window, operand 4, single buffered']
    #allocation12 [shape = 'u8[32768]{0}', space=vmem, size = 0x8000, scoped, tag = 'output window, operand 0, single buffered']
    %10 = vsyncpa [#allocation4], 0
    %11 = vsyncpa [#allocation7], 0
    %s12 = scalar_lea.sflag [#allocation7], 1
    %13 = vsyncpa %s12, 0
    %14 = vsyncpa [#allocation10], 0
    %s15 = scalar_lea.sflag [#allocation10], 1
    %16 = vsyncpa %s15, 0
    %17 = vsyncpa [#allocation5], 0
    loop: start=0, step=1, limit=6
    $region2: #{tpu_custom_call.1} parent=1 // loop_pre_header
      _
    $region3: #{tpu_custom_call.1} parent=1 // loop_header
      %s19 = sphi 0, %s23
      %p20 = scmp.ge.s32.totalorder %s19, 6
      %s26 = sphi 0, %s38
      %s27 = sphi 0, %s34
      %s28 = sphi 0, %s26
      %s29 = sphi 0, %s27
      %s30 = sphi 0, %s28
      %s31 = sphi 0, %s29
      %s41 = sphi 0, %s43
      %s44 = sphi 0, %s41
      %s45 = sphi 0, %s44
      %s61 = sphi 0, %s45
      %s67 = sphi 0, %s69
      %s70 = sphi 0, %s67
      %s71 = sphi 0, %s70
      %s87 = sphi 0, %s71
      %s93 = sphi 0, %s95
      %s96 = sphi 0, %s93
      %s97 = sphi 0, %s96
      %s113 = sphi 0, %s97
      %s119 = sphi 0, %s121
      %s122 = sphi 0, %s119
      %s123 = sphi 0, %s122
      %s139 = sphi 0, %s123
      %s143 = sphi 0, %s143
      %s145 = sphi 0, %s143
      %s146 = sphi 0, %s145
      %s160 = sphi 0, %s146
      %s166 = sphi 0, %s168
      %s169 = sphi 0, %s166
      %s170 = sphi 0, %s169
      %s186 = sphi 0, %s170
    $region4: #{tpu_custom_call.1} parent=1 // loop_header_branch
      %22 = sbr.rel (%p20) target = $region8
    $region5: #{tpu_custom_call.1} parent=1 // loop_body
      %s24 = ssub.s32 %s19, 1
      %s25 = ssub.s32 %s19, 2
      %s32 = sadd.s32 1, %s27
      %p33 = scmp.ge.s32.totalorder %s32, 4
      %s34 = scalar_select %p33, 0, %s32
      %s35 = sadd.s32 1, %s26
      %s36 = scalar_select %p33, %s35, %s26
      %p37 = scmp.ge.s32.totalorder %s36, 1
      %s38 = scalar_select %p37, 0, %s36
      %s39 = ssub.s32 %s26, %s38
      %p40 = scmp.eq.s32.totalorder %s39, 0
      %s42 = sadd.s32 %s41, 1
      %s43 = scalar_select %p40, %s41, %s42
      %p46 = pneg %p40
      %p47 = scmp.eq.s32.totalorder %s19, 3
      %p48 = por %p46, %p47
      %p49 = scmp.ne.s32.totalorder %s41, %s44
      %p50 = scmp.eq.s32.totalorder %s19, 0
      %p51 = por %p49, %p50
      %p52 = scmp.ne.s32.totalorder %s41, %s44
      %p53 = scmp.eq.s32.totalorder %s24, 3
      %p54 = por %p52, %p53
      %p55 = scmp.ne.s32.totalorder %s44, %s45
      %p56 = scmp.eq.s32.totalorder %s24, 0
      %p57 = por %p55, %p56
      %p58 = scmp.ne.s32.totalorder %s44, %s45
      %p59 = scmp.eq.s32.totalorder %s25, 3
      %p60 = por %p58, %p59
      %p62 = scmp.ne.s32.totalorder %s45, %s61
      %p63 = scmp.eq.s32.totalorder %s25, 0
      %p64 = por %p62, %p63
      %s65 = ssub.s32 %s27, %s34
      %p66 = scmp.eq.s32.totalorder %s65, 0
      %s68 = sadd.s32 %s67, 1
      %s69 = scalar_select %p66, %s67, %s68
      %p72 = pneg %p66
      %p73 = scmp.eq.s32.totalorder %s19, 3
      %p74 = por %p72, %p73
      %p75 = scmp.ne.s32.totalorder %s67, %s70
      %p76 = scmp.eq.s32.totalorder %s19, 0
      %p77 = por %p75, %p76
      %p78 = scmp.ne.s32.totalorder %s67, %s70
      %p79 = scmp.eq.s32.totalorder %s24, 3
      %p80 = por %p78, %p79
      %p81 = scmp.ne.s32.totalorder %s70, %s71
      %p82 = scmp.eq.s32.totalorder %s24, 0
      %p83 = por %p81, %p82
      %p84 = scmp.ne.s32.totalorder %s70, %s71
      %p85 = scmp.eq.s32.totalorder %s25, 3
      %p86 = por %p84, %p85
      %p88 = scmp.ne.s32.totalorder %s71, %s87
      %p89 = scmp.eq.s32.totalorder %s25, 0
      %p90 = por %p88, %p89
      %s91 = ssub.s32 %s27, %s34
      %p92 = scmp.eq.s32.totalorder %s91, 0
      %s94 = sadd.s32 %s93, 1
      %s95 = scalar_select %p92, %s93, %s94
      %p98 = pneg %p92
      %p99 = scmp.eq.s32.totalorder %s19, 3
      %p100 = por %p98, %p99
      %p101 = scmp.ne.s32.totalorder %s93, %s96
      %p102 = scmp.eq.s32.totalorder %s19, 0
      %p103 = por %p101, %p102
      %p104 = scmp.ne.s32.totalorder %s93, %s96
      %p105 = scmp.eq.s32.totalorder %s24, 3
      %p106 = por %p104, %p105
      %p107 = scmp.ne.s32.totalorder %s96, %s97
      %p108 = scmp.eq.s32.totalorder %s24, 0
      %p109 = por %p107, %p108
      %p110 = scmp.ne.s32.totalorder %s96, %s97
      %p111 = scmp.eq.s32.totalorder %s25, 3
      %p112 = por %p110, %p111
      %p114 = scmp.ne.s32.totalorder %s97, %s113
      %p115 = scmp.eq.s32.totalorder %s25, 0
      %p116 = por %p114, %p115
      %s117 = ssub.s32 %s27, %s34
      %p118 = scmp.eq.s32.totalorder %s117, 0
      %s120 = sadd.s32 %s119, 1
      %s121 = scalar_select %p118, %s119, %s120
      %p124 = pneg %p118
      %p125 = scmp.eq.s32.totalorder %s19, 3
      %p126 = por %p124, %p125
      %p127 = scmp.ne.s32.totalorder %s119, %s122
      %p128 = scmp.eq.s32.totalorder %s19, 0
      %p129 = por %p127, %p128
      %p130 = scmp.ne.s32.totalorder %s119, %s122
      %p131 = scmp.eq.s32.totalorder %s24, 3
      %p132 = por %p130, %p131
      %p133 = scmp.ne.s32.totalorder %s122, %s123
      %p134 = scmp.eq.s32.totalorder %s24, 0
      %p135 = por %p133, %p134
      %p136 = scmp.ne.s32.totalorder %s122, %s123
      %p137 = scmp.eq.s32.totalorder %s25, 3
      %p138 = por %p136, %p137
      %p140 = scmp.ne.s32.totalorder %s123, %s139
      %p141 = scmp.eq.s32.totalorder %s25, 0
      %p142 = por %p140, %p141
      %s144 = sadd.s32 %s143, 1
      %p147 = scmp.eq.s32.totalorder %s19, 3
      %p148 = scmp.ne.s32.totalorder %s143, %s145
      %p149 = scmp.eq.s32.totalorder %s19, 0
      %p150 = por %p148, %p149
      %p151 = scmp.ne.s32.totalorder %s143, %s145
      %p152 = scmp.eq.s32.totalorder %s24, 3
      %p153 = por %p151, %p152
      %p154 = scmp.ne.s32.totalorder %s145, %s146
      %p155 = scmp.eq.s32.totalorder %s24, 0
      %p156 = por %p154, %p155
      %p157 = scmp.ne.s32.totalorder %s145, %s146
      %p158 = scmp.eq.s32.totalorder %s25, 3
      %p159 = por %p157, %p158
      %p161 = scmp.ne.s32.totalorder %s146, %s160
      %p162 = scmp.eq.s32.totalorder %s25, 0
      %p163 = por %p161, %p162
      %s164 = ssub.s32 %s26, %s38
      %p165 = scmp.eq.s32.totalorder %s164, 0
      %s167 = sadd.s32 %s166, 1
      %s168 = scalar_select %p165, %s166, %s167
      %p171 = pneg %p165
      %p172 = scmp.eq.s32.totalorder %s19, 3
      %p173 = por %p171, %p172
      %p174 = scmp.ne.s32.totalorder %s166, %s169
      %p175 = scmp.eq.s32.totalorder %s19, 0
      %p176 = por %p174, %p175
      %p177 = scmp.ne.s32.totalorder %s166, %s169
      %p178 = scmp.eq.s32.totalorder %s24, 3
      %p179 = por %p177, %p178
      %p180 = scmp.ne.s32.totalorder %s169, %s170
      %p181 = scmp.eq.s32.totalorder %s24, 0
      %p182 = por %p180, %p181
      %p183 = scmp.ne.s32.totalorder %s169, %s170
      %p184 = scmp.eq.s32.totalorder %s25, 3
      %p185 = por %p183, %p184
      %p187 = scmp.ne.s32.totalorder %s170, %s186
      %p188 = scmp.eq.s32.totalorder %s25, 0
      %p189 = por %p187, %p188
      %p190 = scmp.le.s32.totalorder 1, %s19
      %p191 = scmp.lt.s32.totalorder %s19, 5
      %p192 = pnand %p190, %p191
      %p193 = pneg %p192
      // Predicated region
      $region9: #{tpu_custom_call.1} parent=5 // pred_check
        _
      $region10: #{tpu_custom_call.1} parent=5 // pred_check_branch
        %195 = sbr.rel (%p192) target = $region12
      $region11: #{tpu_custom_call.1} parent=5 // pred_region
        %s196 = ssub.s32 %s19, 1
        // Predicated region
        $region13: #{tpu_custom_call.1} parent=11 // pred_check
          %p197 = pneg %p57
        $region14: #{tpu_custom_call.1} parent=11 // pred_check_branch
          %199 = sbr.rel (%p197) target = $region16
        $region15: #{tpu_custom_call.1} parent=11 // pred_region
          %s200 = smul.u32 2, %s28
          %s202 = ssub.s32 512, 512
          %203 = vsyncadd [#allocation4], %s202
          %s204 = smul.addr %s200, 4
          %s205 = smul.addr %s204, 64
          %s206 = scalar_lea.hbm %s0, %s205
          %s207 = sshll.u32 [#allocation3], 4
          %s208 = int_to_ptr.vmem [resolvable:$true] %s207
          %213 = dma.hbm_to_vmem [thread:$0]  %s206, 512, %s208, [#allocation4], 256, 256, 16
        $region16: #{tpu_custom_call.1} parent=11 // pred_fallthru
          _
        // Predicated region
        $region17: #{tpu_custom_call.1} parent=11 // pred_check
          %p214 = pneg %p156
        $region18: #{tpu_custom_call.1} parent=11 // pred_check_branch
          %216 = sbr.rel (%p214) target = $region20
        $region19: #{tpu_custom_call.1} parent=11 // pred_region
          %s218 = ssub.s32 64, 64
          %219 = vsyncadd [#allocation10], %s218
          %s221 = sshll.u32 [#allocation11], 4
          %s222 = int_to_ptr.vmem [resolvable:$true] %s221
          %224 = dma.hbm_to_vmem [thread:$0]  %s4, 64, %s222, [#allocation10]
        $region20: #{tpu_custom_call.1} parent=11 // pred_fallthru
          _
      $region12: #{tpu_custom_call.1} parent=5 // pred_fallthru
        _
      %p225 = scmp.lt.s32.totalorder %s19, 4
      // Predicated region
      $region21: #{tpu_custom_call.1} parent=5 // pred_check
        %p226 = pneg %p225
      $region22: #{tpu_custom_call.1} parent=5 // pred_check_branch
        %228 = sbr.rel (%p226) target = $region24
      $region23: #{tpu_custom_call.1} parent=5 // pred_region
        // Predicated region
        $region25: #{tpu_custom_call.1} parent=23 // pred_check
          %p229 = pneg %p77
        $region26: #{tpu_custom_call.1} parent=23 // pred_check_branch
          %231 = sbr.rel (%p229) target = $region28
        $region27: #{tpu_custom_call.1} parent=23 // pred_region
          %s232 = sand.u32 %s19, 1
          %s233 = scalar_lea.sflag [#allocation7], %s232
          %s234 = sand.u32 %s67, 1
          %s235 = smul.addr %s234, 1024
          %s236 = scalar_lea.vmem [#allocation6], %s235
          %s237 = smul.u32 4, %s27
          %s239 = ssub.s32 16384, 16384
          %240 = vsyncadd %s233, %s239
          %s241 = smul.addr %s237, 64
          %s242 = scalar_lea.hbm %s1, %s241
          %s243 = sshll.u32 %s236, 4
          %s244 = int_to_ptr.vmem [resolvable:$true] %s243
          %249 = dma.hbm_to_vmem [thread:$0]  %s242, 16384, %s244, %s233, 1024, 256, 16
        $region28: #{tpu_custom_call.1} parent=23 // pred_fallthru
          _
        // Predicated region
        $region29: #{tpu_custom_call.1} parent=23 // pred_check
          %p250 = pneg %p103
        $region30: #{tpu_custom_call.1} parent=23 // pred_check_branch
          %252 = sbr.rel (%p250) target = $region32
        $region31: #{tpu_custom_call.1} parent=23 // pred_region
          %s253 = sand.u32 %s19, 1
          %s254 = scalar_lea.sflag [#allocation7], %s253
          %s255 = sand.u32 %s93, 1
          %s256 = smul.addr %s255, 4
          %s257 = scalar_lea.vmem [#allocation8], %s256
          %s258 = smul.u32 4, %s27
          %s260 = ssub.s32 64, 64
          %261 = vsyncadd %s254, %s260
          %s262 = smul.addr %s258, 16
          %s263 = scalar_lea.hbm %s2, %s262
          %s265 = sshll.u32 %s257, 4
          %s266 = int_to_ptr.vmem [resolvable:$true] %s265
          %268 = dma.hbm_to_vmem [thread:$0]  %s263, 64, %s266, %s254
        $region32: #{tpu_custom_call.1} parent=23 // pred_fallthru
          _
        // Predicated region
        $region33: #{tpu_custom_call.1} parent=23 // pred_check
          %p269 = pneg %p129
        $region34: #{tpu_custom_call.1} parent=23 // pred_check_branch
          %271 = sbr.rel (%p269) target = $region36
        $region35: #{tpu_custom_call.1} parent=23 // pred_region
          %s272 = sand.u32 %s19, 1
          %s273 = scalar_lea.sflag [#allocation10], %s272
          %s274 = sand.u32 %s119, 1
          %s275 = smul.addr %s274, 1024
          %s276 = scalar_lea.vmem [#allocation9], %s275
          %s277 = smul.u32 64, %s27
          %s279 = ssub.s32 16384, 16384
          %280 = vsyncadd %s273, %s279
          %s281 = smul.addr %s277, 4
          %s282 = smul.addr %s281, 64
          %s283 = scalar_lea.hbm %s3, %s282
          %s284 = sshll.u32 %s276, 4
          %s285 = int_to_ptr.vmem [resolvable:$true] %s284
          %290 = dma.hbm_to_vmem [thread:$0]  %s283, 16384, %s285, %s273, 256, 256, 16
        $region36: #{tpu_custom_call.1} parent=23 // pred_fallthru
          _
      $region24: #{tpu_custom_call.1} parent=5 // pred_fallthru
        _
      %p291 = scmp.le.s32.totalorder 1, %s19
      %p292 = scmp.lt.s32.totalorder %s19, 5
      %p293 = pnand %p291, %p292
      %p294 = pneg %p293
      // Predicated region
      $region37: #{tpu_custom_call.1} parent=5 // pred_check
        _
      $region38: #{tpu_custom_call.1} parent=5 // pred_check_branch
        %296 = sbr.rel (%p293) target = $region40
      $region39: #{tpu_custom_call.1} parent=5 // pred_region
        %s297 = ssub.s32 %s19, 1
        // Predicated region
        $region41: #{tpu_custom_call.1} parent=39 // pred_check
          %p298 = pneg %p57
        $region42: #{tpu_custom_call.1} parent=39 // pred_check_branch
          %300 = sbr.rel (%p298) target = $region44
        $region43: #{tpu_custom_call.1} parent=39 // pred_region
          %301 = dma.done [#allocation4], 512
        $region44: #{tpu_custom_call.1} parent=39 // pred_fallthru
          _
        %s302 = sand.u32 %s24, 1
        %s303 = scalar_lea.sflag [#allocation7], %s302
        %s304 = sand.u32 %s70, 1
        %s305 = smul.addr %s304, 1024
        %s306 = scalar_lea.vmem [#allocation6], %s305
        // Predicated region
        $region45: #{tpu_custom_call.1} parent=39 // pred_check
          %p307 = pneg %p83
        $region46: #{tpu_custom_call.1} parent=39 // pred_check_branch
          %309 = sbr.rel (%p307) target = $region48
        $region47: #{tpu_custom_call.1} parent=39 // pred_region
          %310 = dma.done %s303, 16384
        $region48: #{tpu_custom_call.1} parent=39 // pred_fallthru
          _
        %s311 = sand.u32 %s24, 1
        %s312 = scalar_lea.sflag [#allocation7], %s311
        %s313 = sand.u32 %s96, 1
        %s314 = smul.addr %s313, 4
        %s315 = scalar_lea.vmem [#allocation8], %s314
        // Predicated region
        $region49: #{tpu_custom_call.1} parent=39 // pred_check
          %p316 = pneg %p109
        $region50: #{tpu_custom_call.1} parent=39 // pred_check_branch
          %318 = sbr.rel (%p316) target = $region52
        $region51: #{tpu_custom_call.1} parent=39 // pred_region
          %319 = dma.done %s312, 64
        $region52: #{tpu_custom_call.1} parent=39 // pred_fallthru
          _
        %s320 = sand.u32 %s24, 1
        %s321 = scalar_lea.sflag [#allocation10], %s320
        %s322 = sand.u32 %s122, 1
        %s323 = smul.addr %s322, 1024
        %s324 = scalar_lea.vmem [#allocation9], %s323
        // Predicated region
        $region53: #{tpu_custom_call.1} parent=39 // pred_check
          %p325 = pneg %p135
        $region54: #{tpu_custom_call.1} parent=39 // pred_check_branch
          %327 = sbr.rel (%p325) target = $region56
        $region55: #{tpu_custom_call.1} parent=39 // pred_region
          %328 = dma.done %s321, 16384
        $region56: #{tpu_custom_call.1} parent=39 // pred_fallthru
          _
        // Predicated region
        $region57: #{tpu_custom_call.1} parent=39 // pred_check
          %p329 = pneg %p156
        $region58: #{tpu_custom_call.1} parent=39 // pred_check_branch
          %331 = sbr.rel (%p329) target = $region60
        $region59: #{tpu_custom_call.1} parent=39 // pred_region
          %332 = dma.done [#allocation10], 64
        $region60: #{tpu_custom_call.1} parent=39 // pred_fallthru
          _
        %p333 = pneg %p57
        %p334 = pneg %p54
        %s335 = sand.u32 %s24, 1
        %s336 = scalar_lea.sflag [#allocation7], %s335
        %s337 = sand.u32 %s70, 1
        %s338 = smul.addr %s337, 1024
        %s339 = scalar_lea.vmem [#allocation6], %s338
        %p340 = pneg %p83
        %p341 = pneg %p80
        %s342 = sand.u32 %s24, 1
        %s343 = scalar_lea.sflag [#allocation7], %s342
        %s344 = sand.u32 %s96, 1
        %s345 = smul.addr %s344, 4
        %s346 = scalar_lea.vmem [#allocation8], %s345
        %p347 = pneg %p109
        %p348 = pneg %p106
        %s349 = sand.u32 %s24, 1
        %s350 = scalar_lea.sflag [#allocation10], %s349
        %s351 = sand.u32 %s122, 1
        %s352 = smul.addr %s351, 1024
        %s353 = scalar_lea.vmem [#allocation9], %s352
        %p354 = pneg %p135
        %p355 = pneg %p132
        %p356 = pneg %p156
        %p357 = pneg %p153
        %p358 = pneg %p182
        %p359 = pneg %p179
        %s360 = smul.u32 2, %s28
        %s361 = smul.u32 4, %s29
        %s362 = smul.u32 4, %s29
        %s363 = smul.u32 64, %s29
        %s364 = smul.u32 2, %s28
        %p365 = scmp.eq.s32.totalorder %s29, 0
        // Predicated region
        $region61: #{tpu_custom_call.1} parent=39 // pred_check
          %p366 = pneg %p365
        $region62: #{tpu_custom_call.1} parent=39 // pred_check_branch
          %368 = sbr.rel (%p366) target = $region64
        $region63: #{tpu_custom_call.1} parent=39 // pred_region
          %369 = vst [vmem:[#allocation2] sm:$0xff] 0.0
          %370 = vst [vmem:[#allocation2 + $0x8] sm:$0xff] 0.0
          %371 = vst [vmem:[#allocation2 + $0x10] sm:$0xff] 0.0
          %372 = vst [vmem:[#allocation2 + $0x18] sm:$0xff] 0.0
          %373 = vst [vmem:[#allocation2 + $0x20] sm:$0xff] 0.0
          %374 = vst [vmem:[#allocation2 + $0x28] sm:$0xff] 0.0
          %375 = vst [vmem:[#allocation2 + $0x30] sm:$0xff] 0.0
          %376 = vst [vmem:[#allocation2 + $0x38] sm:$0xff] 0.0
        $region64: #{tpu_custom_call.1} parent=39 // pred_fallthru
          _
        %v377 = vld [vmem:[#allocation3] sm:$0xff]
        %v378 = vld [vmem:[#allocation3 + $0x8] sm:$0xff]
        %v379 = vld [vmem:[#allocation3 + $0x10] sm:$0xff]
        %v380 = vld [vmem:[#allocation3 + $0x18] sm:$0xff]
        %v381 = vld [vmem:[%s306] sm:$0xff]
        %v382 = vld [vmem:[%s306 + $0x8] sm:$0xff]
        %v383 = vld [vmem:[%s306 + $0x10] sm:$0xff]
        %v384 = vld [vmem:[%s306 + $0x18] sm:$0xff]
        %v385 = vld [vmem:[%s306 + $0x20] sm:$0xff]
        %v386 = vld [vmem:[%s306 + $0x28] sm:$0xff]
        %v387 = vld [vmem:[%s306 + $0x30] sm:$0xff]
        %v388 = vld [vmem:[%s306 + $0x38] sm:$0xff]
        %v389 = vld [vmem:[%s306 + $0x40] sm:$0xff]
        %v390 = vld [vmem:[%s306 + $0x48] sm:$0xff]
        %v391 = vld [vmem:[%s306 + $0x50] sm:$0xff]
        %v392 = vld [vmem:[%s306 + $0x58] sm:$0xff]
        %v393 = vld [vmem:[%s306 + $0x60] sm:$0xff]
        %v394 = vld [vmem:[%s306 + $0x68] sm:$0xff]
        %v395 = vld [vmem:[%s306 + $0x70] sm:$0xff]
        %v396 = vld [vmem:[%s306 + $0x78] sm:$0xff]
        %v397 = vld [vmem:[%s306 + $0x80] sm:$0xff]
        %v398 = vld [vmem:[%s306 + $0x88] sm:$0xff]
        %v399 = vld [vmem:[%s306 + $0x90] sm:$0xff]
        %v400 = vld [vmem:[%s306 + $0x98] sm:$0xff]
        %v401 = vld [vmem:[%s306 + $0xa0] sm:$0xff]
        %v402 = vld [vmem:[%s306 + $0xa8] sm:$0xff]
        %v403 = vld [vmem:[%s306 + $0xb0] sm:$0xff]
        %v404 = vld [vmem:[%s306 + $0xb8] sm:$0xff]
        %v405 = vld [vmem:[%s306 + $0xc0] sm:$0xff]
        %v406 = vld [vmem:[%s306 + $0xc8] sm:$0xff]
        %v407 = vld [vmem:[%s306 + $0xd0] sm:$0xff]
        %v408 = vld [vmem:[%s306 + $0xd8] sm:$0xff]
        %v409 = vld [vmem:[%s306 + $0xe0] sm:$0xff]
        %v410 = vld [vmem:[%s306 + $0xe8] sm:$0xff]
        %v411 = vld [vmem:[%s306 + $0xf0] sm:$0xff]
        %v412 = vld [vmem:[%s306 + $0xf8] sm:$0xff]
        %v413 = vld [vmem:[%s306 + $0x100] sm:$0xff]
        %v414 = vld [vmem:[%s306 + $0x108] sm:$0xff]
        %v415 = vld [vmem:[%s306 + $0x110] sm:$0xff]
        %v416 = vld [vmem:[%s306 + $0x118] sm:$0xff]
        %v417 = vld [vmem:[%s306 + $0x120] sm:$0xff]
        %v418 = vld [vmem:[%s306 + $0x128] sm:$0xff]
        %v419 = vld [vmem:[%s306 + $0x130] sm:$0xff]
        %v420 = vld [vmem:[%s306 + $0x138] sm:$0xff]
        %v421 = vld [vmem:[%s306 + $0x140] sm:$0xff]
        %v422 = vld [vmem:[%s306 + $0x148] sm:$0xff]
        %v423 = vld [vmem:[%s306 + $0x150] sm:$0xff]
        %v424 = vld [vmem:[%s306 + $0x158] sm:$0xff]
        %v425 = vld [vmem:[%s306 + $0x160] sm:$0xff]
        %v426 = vld [vmem:[%s306 + $0x168] sm:$0xff]
        %v427 = vld [vmem:[%s306 + $0x170] sm:$0xff]
        %v428 = vld [vmem:[%s306 + $0x178] sm:$0xff]
        %v429 = vld [vmem:[%s306 + $0x180] sm:$0xff]
        %v430 = vld [vmem:[%s306 + $0x188] sm:$0xff]
        %v431 = vld [vmem:[%s306 + $0x190] sm:$0xff]
        %v432 = vld [vmem:[%s306 + $0x198] sm:$0xff]
        %v433 = vld [vmem:[%s306 + $0x1a0] sm:$0xff]
        %v434 = vld [vmem:[%s306 + $0x1a8] sm:$0xff]
        %v435 = vld [vmem:[%s306 + $0x1b0] sm:$0xff]
        %v436 = vld [vmem:[%s306 + $0x1b8] sm:$0xff]
        %v437 = vld [vmem:[%s306 + $0x1c0] sm:$0xff]
        %v438 = vld [vmem:[%s306 + $0x1c8] sm:$0xff]
        %v439 = vld [vmem:[%s306 + $0x1d0] sm:$0xff]
        %v440 = vld [vmem:[%s306 + $0x1d8] sm:$0xff]
        %v441 = vld [vmem:[%s306 + $0x1e0] sm:$0xff]
        %v442 = vld [vmem:[%s306 + $0x1e8] sm:$0xff]
        %v443 = vld [vmem:[%s306 + $0x1f0] sm:$0xff]
        %v444 = vld [vmem:[%s306 + $0x1f8] sm:$0xff]
        %v445 = vld [vmem:[%s306 + $0x200] sm:$0xff]
        %v446 = vld [vmem:[%s306 + $0x208] sm:$0xff]
        %v447 = vld [vmem:[%s306 + $0x210] sm:$0xff]
        %v448 = vld [vmem:[%s306 + $0x218] sm:$0xff]
        %v449 = vld [vmem:[%s306 + $0x220] sm:$0xff]
        %v450 = vld [vmem:[%s306 + $0x228] sm:$0xff]
        %v451 = vld [vmem:[%s306 + $0x230] sm:$0xff]
        %v452 = vld [vmem:[%s306 + $0x238] sm:$0xff]
        %v453 = vld [vmem:[%s306 + $0x240] sm:$0xff]
        %v454 = vld [vmem:[%s306 + $0x248] sm:$0xff]
        %v455 = vld [vmem:[%s306 + $0x250] sm:$0xff]
        %v456 = vld [vmem:[%s306 + $0x258] sm:$0xff]
        %v457 = vld [vmem:[%s306 + $0x260] sm:$0xff]
        %v458 = vld [vmem:[%s306 + $0x268] sm:$0xff]
        %v459 = vld [vmem:[%s306 + $0x270] sm:$0xff]
        %v460 = vld [vmem:[%s306 + $0x278] sm:$0xff]
        %v461 = vld [vmem:[%s306 + $0x280] sm:$0xff]
        %v462 = vld [vmem:[%s306 + $0x288] sm:$0xff]
        %v463 = vld [vmem:[%s306 + $0x290] sm:$0xff]
        %v464 = vld [vmem:[%s306 + $0x298] sm:$0xff]
        %v465 = vld [vmem:[%s306 + $0x2a0] sm:$0xff]
        %v466 = vld [vmem:[%s306 + $0x2a8] sm:$0xff]
        %v467 = vld [vmem:[%s306 + $0x2b0] sm:$0xff]
        %v468 = vld [vmem:[%s306 + $0x2b8] sm:$0xff]
        %v469 = vld [vmem:[%s306 + $0x2c0] sm:$0xff]
        %v470 = vld [vmem:[%s306 + $0x2c8] sm:$0xff]
        %v471 = vld [vmem:[%s306 + $0x2d0] sm:$0xff]
        %v472 = vld [vmem:[%s306 + $0x2d8] sm:$0xff]
        %v473 = vld [vmem:[%s306 + $0x2e0] sm:$0xff]
        %v474 = vld [vmem:[%s306 + $0x2e8] sm:$0xff]
        %v475 = vld [vmem:[%s306 + $0x2f0] sm:$0xff]
        %v476 = vld [vmem:[%s306 + $0x2f8] sm:$0xff]
        %v477 = vld [vmem:[%s306 + $0x300] sm:$0xff]
        %v478 = vld [vmem:[%s306 + $0x308] sm:$0xff]
        %v479 = vld [vmem:[%s306 + $0x310] sm:$0xff]
        %v480 = vld [vmem:[%s306 + $0x318] sm:$0xff]
        %v481 = vld [vmem:[%s306 + $0x320] sm:$0xff]
        %v482 = vld [vmem:[%s306 + $0x328] sm:$0xff]
        %v483 = vld [vmem:[%s306 + $0x330] sm:$0xff]
        %v484 = vld [vmem:[%s306 + $0x338] sm:$0xff]
        %v485 = vld [vmem:[%s306 + $0x340] sm:$0xff]
        %v486 = vld [vmem:[%s306 + $0x348] sm:$0xff]
        %v487 = vld [vmem:[%s306 + $0x350] sm:$0xff]
        %v488 = vld [vmem:[%s306 + $0x358] sm:$0xff]
        %v489 = vld [vmem:[%s306 + $0x360] sm:$0xff]
        %v490 = vld [vmem:[%s306 + $0x368] sm:$0xff]
        %v491 = vld [vmem:[%s306 + $0x370] sm:$0xff]
        %v492 = vld [vmem:[%s306 + $0x378] sm:$0xff]
        %v493 = vld [vmem:[%s306 + $0x380] sm:$0xff]
        %v494 = vld [vmem:[%s306 + $0x388] sm:$0xff]
        %v495 = vld [vmem:[%s306 + $0x390] sm:$0xff]
        %v496 = vld [vmem:[%s306 + $0x398] sm:$0xff]
        %v497 = vld [vmem:[%s306 + $0x3a0] sm:$0xff]
        %v498 = vld [vmem:[%s306 + $0x3a8] sm:$0xff]
        %v499 = vld [vmem:[%s306 + $0x3b0] sm:$0xff]
        %v500 = vld [vmem:[%s306 + $0x3b8] sm:$0xff]
        %v501 = vld [vmem:[%s306 + $0x3c0] sm:$0xff]
        %v502 = vld [vmem:[%s306 + $0x3c8] sm:$0xff]
        %v503 = vld [vmem:[%s306 + $0x3d0] sm:$0xff]
        %v504 = vld [vmem:[%s306 + $0x3d8] sm:$0xff]
        %v505 = vld [vmem:[%s306 + $0x3e0] sm:$0xff]
        %v506 = vld [vmem:[%s306 + $0x3e8] sm:$0xff]
        %v507 = vld [vmem:[%s306 + $0x3f0] sm:$0xff]
        %v508 = vld [vmem:[%s306 + $0x3f8] sm:$0xff]
        %v509 = vld [vmem:[%s315] sm:$0xf]
        %v511 = vlaneseq
        %v512 = vshrl.u32 %v511, 7
        %v513 = vsub.s32 0, %v512
        %v514 = vrot.slane %v509, %v513
        %v515 = vlaneseq
        %v516 = vshrl.u32 %v515, 7
        %v517 = vsub.s32 1, %v516
        %v518 = vrot.slane %v509, %v517
        %v519 = vlaneseq
        %v520 = vshrl.u32 %v519, 7
        %v521 = vsub.s32 2, %v520
        %v522 = vrot.slane %v509, %v521
        %v523 = vlaneseq
        %v524 = vshrl.u32 %v523, 7
        %v525 = vsub.s32 3, %v524
        %v526 = vrot.slane %v509, %v525
        %v535 = vunpack.c.l.b16 %v377
        %v536 = vunpack.c.h.b16 %v377
        %v537 = vunpack.c.l.b16 %v378
        %v538 = vunpack.c.h.b16 %v378
        %v539 = vunpack.c.l.b16 %v379
        %v540 = vunpack.c.h.b16 %v379
        %v541 = vunpack.c.l.b16 %v380
        %v542 = vunpack.c.h.b16 %v380
        %v543 = vpack.c.b16 %v539, %v535
        %v544 = vpack.c.b16 %v540, %v536
        %v545 = vpack.c.b16 %v541, %v537
        %v546 = vpack.c.b16 %v542, %v538
        %v679 = vunpack.c.l.b16 %v381
        %v680 = vunpack.c.h.b16 %v381
        %v681 = vunpack.c.l.b16 %v382
        %v682 = vunpack.c.h.b16 %v382
        %v683 = vunpack.c.l.b16 %v383
        %v684 = vunpack.c.h.b16 %v383
        %v685 = vunpack.c.l.b16 %v384
        %v686 = vunpack.c.h.b16 %v384
        %v687 = vunpack.c.l.b16 %v385
        %v688 = vunpack.c.h.b16 %v385
        %v689 = vunpack.c.l.b16 %v386
        %v690 = vunpack.c.h.b16 %v386
        %v691 = vunpack.c.l.b16 %v387
        %v692 = vunpack.c.h.b16 %v387
        %v693 = vunpack.c.l.b16 %v388
        %v694 = vunpack.c.h.b16 %v388
        %v695 = vunpack.c.l.b16 %v389
        %v696 = vunpack.c.h.b16 %v389
        %v697 = vunpack.c.l.b16 %v390
        %v698 = vunpack.c.h.b16 %v390
        %v699 = vunpack.c.l.b16 %v391
        %v700 = vunpack.c.h.b16 %v391
        %v701 = vunpack.c.l.b16 %v392
        %v702 = vunpack.c.h.b16 %v392
        %v703 = vunpack.c.l.b16 %v393
        %v704 = vunpack.c.h.b16 %v393
        %v705 = vunpack.c.l.b16 %v394
        %v706 = vunpack.c.h.b16 %v394
        %v707 = vunpack.c.l.b16 %v395
        %v708 = vunpack.c.h.b16 %v395
        %v709 = vunpack.c.l.b16 %v396
        %v710 = vunpack.c.h.b16 %v396
        %v711 = vunpack.c.l.b16 %v397
        %v712 = vunpack.c.h.b16 %v397
        %v713 = vunpack.c.l.b16 %v398
        %v714 = vunpack.c.h.b16 %v398
        %v715 = vunpack.c.l.b16 %v399
        %v716 = vunpack.c.h.b16 %v399
        %v717 = vunpack.c.l.b16 %v400
        %v718 = vunpack.c.h.b16 %v400
        %v719 = vunpack.c.l.b16 %v401
        %v720 = vunpack.c.h.b16 %v401
        %v721 = vunpack.c.l.b16 %v402
        %v722 = vunpack.c.h.b16 %v402
        %v723 = vunpack.c.l.b16 %v403
        %v724 = vunpack.c.h.b16 %v403
        %v725 = vunpack.c.l.b16 %v404
        %v726 = vunpack.c.h.b16 %v404
        %v727 = vunpack.c.l.b16 %v405
        %v728 = vunpack.c.h.b16 %v405
        %v729 = vunpack.c.l.b16 %v406
        %v730 = vunpack.c.h.b16 %v406
        %v731 = vunpack.c.l.b16 %v407
        %v732 = vunpack.c.h.b16 %v407
        %v733 = vunpack.c.l.b16 %v408
        %v734 = vunpack.c.h.b16 %v408
        %v735 = vunpack.c.l.b16 %v409
        %v736 = vunpack.c.h.b16 %v409
        %v737 = vunpack.c.l.b16 %v410
        %v738 = vunpack.c.h.b16 %v410
        %v739 = vunpack.c.l.b16 %v411
        %v740 = vunpack.c.h.b16 %v411
        %v741 = vunpack.c.l.b16 %v412
        %v742 = vunpack.c.h.b16 %v412
        %v743 = vunpack.c.l.b16 %v413
        %v744 = vunpack.c.h.b16 %v413
        %v745 = vunpack.c.l.b16 %v414
        %v746 = vunpack.c.h.b16 %v414
        %v747 = vunpack.c.l.b16 %v415
        %v748 = vunpack.c.h.b16 %v415
        %v749 = vunpack.c.l.b16 %v416
        %v750 = vunpack.c.h.b16 %v416
        %v751 = vunpack.c.l.b16 %v417
        %v752 = vunpack.c.h.b16 %v417
        %v753 = vunpack.c.l.b16 %v418
        %v754 = vunpack.c.h.b16 %v418
        %v755 = vunpack.c.l.b16 %v419
        %v756 = vunpack.c.h.b16 %v419
        %v757 = vunpack.c.l.b16 %v420
        %v758 = vunpack.c.h.b16 %v420
        %v759 = vunpack.c.l.b16 %v421
        %v760 = vunpack.c.h.b16 %v421
        %v761 = vunpack.c.l.b16 %v422
        %v762 = vunpack.c.h.b16 %v422
        %v763 = vunpack.c.l.b16 %v423
        %v764 = vunpack.c.h.b16 %v423
        %v765 = vunpack.c.l.b16 %v424
        %v766 = vunpack.c.h.b16 %v424
        %v767 = vunpack.c.l.b16 %v425
        %v768 = vunpack.c.h.b16 %v425
        %v769 = vunpack.c.l.b16 %v426
        %v770 = vunpack.c.h.b16 %v426
        %v771 = vunpack.c.l.b16 %v427
        %v772 = vunpack.c.h.b16 %v427
        %v773 = vunpack.c.l.b16 %v428
        %v774 = vunpack.c.h.b16 %v428
        %v775 = vunpack.c.l.b16 %v429
        %v776 = vunpack.c.h.b16 %v429
        %v777 = vunpack.c.l.b16 %v430
        %v778 = vunpack.c.h.b16 %v430
        %v779 = vunpack.c.l.b16 %v431
        %v780 = vunpack.c.h.b16 %v431
        %v781 = vunpack.c.l.b16 %v432
        %v782 = vunpack.c.h.b16 %v432
        %v783 = vunpack.c.l.b16 %v433
        %v784 = vunpack.c.h.b16 %v433
        %v785 = vunpack.c.l.b16 %v434
        %v786 = vunpack.c.h.b16 %v434
        %v787 = vunpack.c.l.b16 %v435
        %v788 = vunpack.c.h.b16 %v435
        %v789 = vunpack.c.l.b16 %v436
        %v790 = vunpack.c.h.b16 %v436
        %v791 = vunpack.c.l.b16 %v437
        %v792 = vunpack.c.h.b16 %v437
        %v793 = vunpack.c.l.b16 %v438
        %v794 = vunpack.c.h.b16 %v438
        %v795 = vunpack.c.l.b16 %v439
        %v796 = vunpack.c.h.b16 %v439
        %v797 = vunpack.c.l.b16 %v440
        %v798 = vunpack.c.h.b16 %v440
        %v799 = vunpack.c.l.b16 %v441
        %v800 = vunpack.c.h.b16 %v441
        %v801 = vunpack.c.l.b16 %v442
        %v802 = vunpack.c.h.b16 %v442
        %v803 = vunpack.c.l.b16 %v443
        %v804 = vunpack.c.h.b16 %v443
        %v805 = vunpack.c.l.b16 %v444
        %v806 = vunpack.c.h.b16 %v444
        %v807 = vunpack.c.l.b16 %v445
        %v808 = vunpack.c.h.b16 %v445
        %v809 = vunpack.c.l.b16 %v446
        %v810 = vunpack.c.h.b16 %v446
        %v811 = vunpack.c.l.b16 %v447
        %v812 = vunpack.c.h.b16 %v447
        %v813 = vunpack.c.l.b16 %v448
        %v814 = vunpack.c.h.b16 %v448
        %v815 = vunpack.c.l.b16 %v449
        %v816 = vunpack.c.h.b16 %v449
        %v817 = vunpack.c.l.b16 %v450
        %v818 = vunpack.c.h.b16 %v450
        %v819 = vunpack.c.l.b16 %v451
        %v820 = vunpack.c.h.b16 %v451
        %v821 = vunpack.c.l.b16 %v452
        %v822 = vunpack.c.h.b16 %v452
        %v823 = vunpack.c.l.b16 %v453
        %v824 = vunpack.c.h.b16 %v453
        %v825 = vunpack.c.l.b16 %v454
        %v826 = vunpack.c.h.b16 %v454
        %v827 = vunpack.c.l.b16 %v455
        %v828 = vunpack.c.h.b16 %v455
        %v829 = vunpack.c.l.b16 %v456
        %v830 = vunpack.c.h.b16 %v456
        %v831 = vunpack.c.l.b16 %v457
        %v832 = vunpack.c.h.b16 %v457
        %v833 = vunpack.c.l.b16 %v458
        %v834 = vunpack.c.h.b16 %v458
        %v835 = vunpack.c.l.b16 %v459
        %v836 = vunpack.c.h.b16 %v459
        %v837 = vunpack.c.l.b16 %v460
        %v838 = vunpack.c.h.b16 %v460
        %v839 = vunpack.c.l.b16 %v461
        %v840 = vunpack.c.h.b16 %v461
        %v841 = vunpack.c.l.b16 %v462
        %v842 = vunpack.c.h.b16 %v462
        %v843 = vunpack.c.l.b16 %v463
        %v844 = vunpack.c.h.b16 %v463
        %v845 = vunpack.c.l.b16 %v464
        %v846 = vunpack.c.h.b16 %v464
        %v847 = vunpack.c.l.b16 %v465
        %v848 = vunpack.c.h.b16 %v465
        %v849 = vunpack.c.l.b16 %v466
        %v850 = vunpack.c.h.b16 %v466
        %v851 = vunpack.c.l.b16 %v467
        %v852 = vunpack.c.h.b16 %v467
        %v853 = vunpack.c.l.b16 %v468
        %v854 = vunpack.c.h.b16 %v468
        %v855 = vunpack.c.l.b16 %v469
        %v856 = vunpack.c.h.b16 %v469
        %v857 = vunpack.c.l.b16 %v470
        %v858 = vunpack.c.h.b16 %v470
        %v859 = vunpack.c.l.b16 %v471
        %v860 = vunpack.c.h.b16 %v471
        %v861 = vunpack.c.l.b16 %v472
        %v862 = vunpack.c.h.b16 %v472
        %v863 = vunpack.c.l.b16 %v473
        %v864 = vunpack.c.h.b16 %v473
        %v865 = vunpack.c.l.b16 %v474
        %v866 = vunpack.c.h.b16 %v474
        %v867 = vunpack.c.l.b16 %v475
        %v868 = vunpack.c.h.b16 %v475
        %v869 = vunpack.c.l.b16 %v476
        %v870 = vunpack.c.h.b16 %v476
        %v871 = vunpack.c.l.b16 %v477
        %v872 = vunpack.c.h.b16 %v477
        %v873 = vunpack.c.l.b16 %v478
        %v874 = vunpack.c.h.b16 %v478
        %v875 = vunpack.c.l.b16 %v479
        %v876 = vunpack.c.h.b16 %v479
        %v877 = vunpack.c.l.b16 %v480
        %v878 = vunpack.c.h.b16 %v480
        %v879 = vunpack.c.l.b16 %v481
        %v880 = vunpack.c.h.b16 %v481
        %v881 = vunpack.c.l.b16 %v482
        %v882 = vunpack.c.h.b16 %v482
        %v883 = vunpack.c.l.b16 %v483
        %v884 = vunpack.c.h.b16 %v483
        %v885 = vunpack.c.l.b16 %v484
        %v886 = vunpack.c.h.b16 %v484
        %v887 = vunpack.c.l.b16 %v485
        %v888 = vunpack.c.h.b16 %v485
        %v889 = vunpack.c.l.b16 %v486
        %v890 = vunpack.c.h.b16 %v486
        %v891 = vunpack.c.l.b16 %v487
        %v892 = vunpack.c.h.b16 %v487
        %v893 = vunpack.c.l.b16 %v488
        %v894 = vunpack.c.h.b16 %v488
        %v895 = vunpack.c.l.b16 %v489
        %v896 = vunpack.c.h.b16 %v489
        %v897 = vunpack.c.l.b16 %v490
        %v898 = vunpack.c.h.b16 %v490
        %v899 = vunpack.c.l.b16 %v491
        %v900 = vunpack.c.h.b16 %v491
        %v901 = vunpack.c.l.b16 %v492
        %v902 = vunpack.c.h.b16 %v492
        %v903 = vunpack.c.l.b16 %v493
        %v904 = vunpack.c.h.b16 %v493
        %v905 = vunpack.c.l.b16 %v494
        %v906 = vunpack.c.h.b16 %v494
        %v907 = vunpack.c.l.b16 %v495
        %v908 = vunpack.c.h.b16 %v495
        %v909 = vunpack.c.l.b16 %v496
        %v910 = vunpack.c.h.b16 %v496
        %v911 = vunpack.c.l.b16 %v497
        %v912 = vunpack.c.h.b16 %v497
        %v913 = vunpack.c.l.b16 %v498
        %v914 = vunpack.c.h.b16 %v498
        %v915 = vunpack.c.l.b16 %v499
        %v916 = vunpack.c.h.b16 %v499
        %v917 = vunpack.c.l.b16 %v500
        %v918 = vunpack.c.h.b16 %v500
        %v919 = vunpack.c.l.b16 %v501
        %v920 = vunpack.c.h.b16 %v501
        %v921 = vunpack.c.l.b16 %v502
        %v922 = vunpack.c.h.b16 %v502
        %v923 = vunpack.c.l.b16 %v503
        %v924 = vunpack.c.h.b16 %v503
        %v925 = vunpack.c.l.b16 %v504
        %v926 = vunpack.c.h.b16 %v504
        %v927 = vunpack.c.l.b16 %v505
        %v928 = vunpack.c.h.b16 %v505
        %v929 = vunpack.c.l.b16 %v506
        %v930 = vunpack.c.h.b16 %v506
        %v931 = vunpack.c.l.b16 %v507
        %v932 = vunpack.c.h.b16 %v507
        %v933 = vunpack.c.l.b16 %v508
        %v934 = vunpack.c.h.b16 %v508
        %v935 = vpack.c.b16 %v683, %v679
        %v936 = vpack.c.b16 %v684, %v680
        %v937 = vpack.c.b16 %v685, %v681
        %v938 = vpack.c.b16 %v686, %v682
        %v939 = vpack.c.b16 %v691, %v687
        %v940 = vpack.c.b16 %v692, %v688
        %v941 = vpack.c.b16 %v693, %v689
        %v942 = vpack.c.b16 %v694, %v690
        %v943 = vpack.c.b16 %v699, %v695
        %v944 = vpack.c.b16 %v700, %v696
        %v945 = vpack.c.b16 %v701, %v697
        %v946 = vpack.c.b16 %v702, %v698
        %v947 = vpack.c.b16 %v707, %v703
        %v948 = vpack.c.b16 %v708, %v704
        %v949 = vpack.c.b16 %v709, %v705
        %v950 = vpack.c.b16 %v710, %v706
        %v951 = vpack.c.b16 %v715, %v711
        %v952 = vpack.c.b16 %v716, %v712
        %v953 = vpack.c.b16 %v717, %v713
        %v954 = vpack.c.b16 %v718, %v714
        %v955 = vpack.c.b16 %v723, %v719
        %v956 = vpack.c.b16 %v724, %v720
        %v957 = vpack.c.b16 %v725, %v721
        %v958 = vpack.c.b16 %v726, %v722
        %v959 = vpack.c.b16 %v731, %v727
        %v960 = vpack.c.b16 %v732, %v728
        %v961 = vpack.c.b16 %v733, %v729
        %v962 = vpack.c.b16 %v734, %v730
        %v963 = vpack.c.b16 %v739, %v735
        %v964 = vpack.c.b16 %v740, %v736
        %v965 = vpack.c.b16 %v741, %v737
        %v966 = vpack.c.b16 %v742, %v738
        %v967 = vpack.c.b16 %v747, %v743
        %v968 = vpack.c.b16 %v748, %v744
        %v969 = vpack.c.b16 %v749, %v745
        %v970 = vpack.c.b16 %v750, %v746
        %v971 = vpack.c.b16 %v755, %v751
        %v972 = vpack.c.b16 %v756, %v752
        %v973 = vpack.c.b16 %v757, %v753
        %v974 = vpack.c.b16 %v758, %v754
        %v975 = vpack.c.b16 %v763, %v759
        %v976 = vpack.c.b16 %v764, %v760
        %v977 = vpack.c.b16 %v765, %v761
        %v978 = vpack.c.b16 %v766, %v762
        %v979 = vpack.c.b16 %v771, %v767
        %v980 = vpack.c.b16 %v772, %v768
        %v981 = vpack.c.b16 %v773, %v769
        %v982 = vpack.c.b16 %v774, %v770
        %v983 = vpack.c.b16 %v779, %v775
        %v984 = vpack.c.b16 %v780, %v776
        %v985 = vpack.c.b16 %v781, %v777
        %v986 = vpack.c.b16 %v782, %v778
        %v987 = vpack.c.b16 %v787, %v783
        %v988 = vpack.c.b16 %v788, %v784
        %v989 = vpack.c.b16 %v789, %v785
        %v990 = vpack.c.b16 %v790, %v786
        %v991 = vpack.c.b16 %v795, %v791
        %v992 = vpack.c.b16 %v796, %v792
        %v993 = vpack.c.b16 %v797, %v793
        %v994 = vpack.c.b16 %v798, %v794
        %v995 = vpack.c.b16 %v803, %v799
        %v996 = vpack.c.b16 %v804, %v800
        %v997 = vpack.c.b16 %v805, %v801
        %v998 = vpack.c.b16 %v806, %v802
        %v999 = vpack.c.b16 %v811, %v807
        %v1000 = vpack.c.b16 %v812, %v808
        %v1001 = vpack.c.b16 %v813, %v809
        %v1002 = vpack.c.b16 %v814, %v810
        %v1003 = vpack.c.b16 %v819, %v815
        %v1004 = vpack.c.b16 %v820, %v816
        %v1005 = vpack.c.b16 %v821, %v817
        %v1006 = vpack.c.b16 %v822, %v818
        %v1007 = vpack.c.b16 %v827, %v823
        %v1008 = vpack.c.b16 %v828, %v824
        %v1009 = vpack.c.b16 %v829, %v825
        %v1010 = vpack.c.b16 %v830, %v826
        %v1011 = vpack.c.b16 %v835, %v831
        %v1012 = vpack.c.b16 %v836, %v832
        %v1013 = vpack.c.b16 %v837, %v833
        %v1014 = vpack.c.b16 %v838, %v834
        %v1015 = vpack.c.b16 %v843, %v839
        %v1016 = vpack.c.b16 %v844, %v840
        %v1017 = vpack.c.b16 %v845, %v841
        %v1018 = vpack.c.b16 %v846, %v842
        %v1019 = vpack.c.b16 %v851, %v847
        %v1020 = vpack.c.b16 %v852, %v848
        %v1021 = vpack.c.b16 %v853, %v849
        %v1022 = vpack.c.b16 %v854, %v850
        %v1023 = vpack.c.b16 %v859, %v855
        %v1024 = vpack.c.b16 %v860, %v856
        %v1025 = vpack.c.b16 %v861, %v857
        %v1026 = vpack.c.b16 %v862, %v858
        %v1027 = vpack.c.b16 %v867, %v863
        %v1028 = vpack.c.b16 %v868, %v864
        %v1029 = vpack.c.b16 %v869, %v865
        %v1030 = vpack.c.b16 %v870, %v866
        %v1031 = vpack.c.b16 %v875, %v871
        %v1032 = vpack.c.b16 %v876, %v872
        %v1033 = vpack.c.b16 %v877, %v873
        %v1034 = vpack.c.b16 %v878, %v874
        %v1035 = vpack.c.b16 %v883, %v879
        %v1036 = vpack.c.b16 %v884, %v880
        %v1037 = vpack.c.b16 %v885, %v881
        %v1038 = vpack.c.b16 %v886, %v882
        %v1039 = vpack.c.b16 %v891, %v887
        %v1040 = vpack.c.b16 %v892, %v888
        %v1041 = vpack.c.b16 %v893, %v889
        %v1042 = vpack.c.b16 %v894, %v890
        %v1043 = vpack.c.b16 %v899, %v895
        %v1044 = vpack.c.b16 %v900, %v896
        %v1045 = vpack.c.b16 %v901, %v897
        %v1046 = vpack.c.b16 %v902, %v898
        %v1047 = vpack.c.b16 %v907, %v903
        %v1048 = vpack.c.b16 %v908, %v904
        %v1049 = vpack.c.b16 %v909, %v905
        %v1050 = vpack.c.b16 %v910, %v906
        %v1051 = vpack.c.b16 %v915, %v911
        %v1052 = vpack.c.b16 %v916, %v912
        %v1053 = vpack.c.b16 %v917, %v913
        %v1054 = vpack.c.b16 %v918, %v914
        %v1055 = vpack.c.b16 %v923, %v919
        %v1056 = vpack.c.b16 %v924, %v920
        %v1057 = vpack.c.b16 %v925, %v921
        %v1058 = vpack.c.b16 %v926, %v922
        %v1059 = vpack.c.b16 %v931, %v927
        %v1060 = vpack.c.b16 %v932, %v928
        %v1061 = vpack.c.b16 %v933, %v929
        %v1062 = vpack.c.b16 %v934, %v930
        %1191 = vmatprep.subr.bf16.mxu0 %v936
        %1192 = vmatpush1.bf16.msra.mxu0 %v935
        %1193 = vmatprep.subr.bf16.mxu0 %v940
        %1194 = vmatpush1.bf16.msra.mxu0 %v939
        %1195 = vmatprep.subr.bf16.mxu0 %v944
        %1196 = vmatpush1.bf16.msra.mxu0 %v943
        %1197 = vmatprep.subr.bf16.mxu0 %v948
        %1198 = vmatpush1.bf16.msra.mxu0 %v947
        %1199 = vmatprep.subr.bf16.mxu0 %v952
        %1200 = vmatpush1.bf16.msra.mxu0 %v951
        %1201 = vmatprep.subr.bf16.mxu0 %v956
        %1202 = vmatpush1.bf16.msra.mxu0 %v955
        %1203 = vmatprep.subr.bf16.mxu0 %v960
        %1204 = vmatpush1.bf16.msra.mxu0 %v959
        %1205 = vmatprep.subr.bf16.mxu0 %v964
        %1206 = vmatpush1.bf16.msra.mxu0 %v963
        %1207 = vmatprep.subr.bf16.mxu0 %v968
        %1208 = vmatpush1.bf16.msra.mxu0 %v967
        %1209 = vmatprep.subr.bf16.mxu0 %v972
        %1210 = vmatpush1.bf16.msra.mxu0 %v971
        %1211 = vmatprep.subr.bf16.mxu0 %v976
        %1212 = vmatpush1.bf16.msra.mxu0 %v975
        %1213 = vmatprep.subr.bf16.mxu0 %v980
        %1214 = vmatpush1.bf16.msra.mxu0 %v979
        %1215 = vmatprep.subr.bf16.mxu0 %v984
        %1216 = vmatpush1.bf16.msra.mxu0 %v983
        %1217 = vmatprep.subr.bf16.mxu0 %v988
        %1218 = vmatpush1.bf16.msra.mxu0 %v987
        %1219 = vmatprep.subr.bf16.mxu0 %v992
        %1220 = vmatpush1.bf16.msra.mxu0 %v991
        %1221 = vmatprep.subr.bf16.mxu0 %v996
        %1222 = vmatpush1.bf16.msra.mxu0 %v995
        %1223 = vmatprep.mubr.bf16.mxu0 %v544
        %1224 = vmatmul.mubr.bf16.gmra.mrb[0].mxu0 %v543
        %v1225 = vpop.f32.mrb[0].mxu0
        %v1226 = vadd.f32 %v514, %v1225
        %v1227 = vpop.f32.mrb[0].mxu0
        %v1228 = vadd.f32 %v518, %v1227
        %v1229 = vpop.f32.mrb[0].mxu0
        %v1230 = vadd.f32 %v514, %v1229
        %v1231 = vpop.f32.mrb[0].mxu0
        %v1232 = vadd.f32 %v518, %v1231
        %1233 = vdwg.mxu0
        %1234 = vmatprep.subr.bf16.mxu0 %v1000
        %1235 = vmatpush1.bf16.msra.mxu0 %v999
        %1236 = vmatprep.subr.bf16.mxu0 %v1004
        %1237 = vmatpush1.bf16.msra.mxu0 %v1003
        %1238 = vmatprep.subr.bf16.mxu0 %v1008
        %1239 = vmatpush1.bf16.msra.mxu0 %v1007
        %1240 = vmatprep.subr.bf16.mxu0 %v1012
        %1241 = vmatpush1.bf16.msra.mxu0 %v1011
        %1242 = vmatprep.subr.bf16.mxu0 %v1016
        %1243 = vmatpush1.bf16.msra.mxu0 %v1015
        %1244 = vmatprep.subr.bf16.mxu0 %v1020
        %1245 = vmatpush1.bf16.msra.mxu0 %v1019
        %1246 = vmatprep.subr.bf16.mxu0 %v1024
        %1247 = vmatpush1.bf16.msra.mxu0 %v1023
        %1248 = vmatprep.subr.bf16.mxu0 %v1028
        %1249 = vmatpush1.bf16.msra.mxu0 %v1027
        %1250 = vmatprep.subr.bf16.mxu0 %v1032
        %1251 = vmatpush1.bf16.msra.mxu0 %v1031
        %1252 = vmatprep.subr.bf16.mxu0 %v1036
        %1253 = vmatpush1.bf16.msra.mxu0 %v1035
        %1254 = vmatprep.subr.bf16.mxu0 %v1040
        %1255 = vmatpush1.bf16.msra.mxu0 %v1039
        %1256 = vmatprep.subr.bf16.mxu0 %v1044
        %1257 = vmatpush1.bf16.msra.mxu0 %v1043
        %1258 = vmatprep.subr.bf16.mxu0 %v1048
        %1259 = vmatpush1.bf16.msra.mxu0 %v1047
        %1260 = vmatprep.subr.bf16.mxu0 %v1052
        %1261 = vmatpush1.bf16.msra.mxu0 %v1051
        %1262 = vmatprep.subr.bf16.mxu0 %v1056
        %1263 = vmatpush1.bf16.msra.mxu0 %v1055
        %1264 = vmatprep.subr.bf16.mxu0 %v1060
        %1265 = vmatpush1.bf16.msra.mxu0 %v1059
        %1266 = vmatprep.mubr.bf16.mxu0 %v546
        %1267 = vmatmul.mubr.bf16.gmra.mrb[0].mxu0 %v545
        %v1268 = vpop.f32.mrb[0].mxu0
        %v1269 = vadd.f32 %v1226, %v1268
        %v1270 = vpop.f32.mrb[0].mxu0
        %v1271 = vadd.f32 %v1228, %v1270
        %v1272 = vpop.f32.mrb[0].mxu0
        %v1273 = vadd.f32 %v1230, %v1272
        %v1274 = vpop.f32.mrb[0].mxu0
        %v1275 = vadd.f32 %v1232, %v1274
        %1276 = vdwg.mxu0
        %1277 = vmatprep.subr.bf16.mxu0 %v938
        %1278 = vmatpush1.bf16.msra.mxu0 %v937
        %1279 = vmatprep.subr.bf16.mxu0 %v942
        %1280 = vmatpush1.bf16.msra.mxu0 %v941
        %1281 = vmatprep.subr.bf16.mxu0 %v946
        %1282 = vmatpush1.bf16.msra.mxu0 %v945
        %1283 = vmatprep.subr.bf16.mxu0 %v950
        %1284 = vmatpush1.bf16.msra.mxu0 %v949
        %1285 = vmatprep.subr.bf16.mxu0 %v954
        %1286 = vmatpush1.bf16.msra.mxu0 %v953
        %1287 = vmatprep.subr.bf16.mxu0 %v958
        %1288 = vmatpush1.bf16.msra.mxu0 %v957
        %1289 = vmatprep.subr.bf16.mxu0 %v962
        %1290 = vmatpush1.bf16.msra.mxu0 %v961
        %1291 = vmatprep.subr.bf16.mxu0 %v966
        %1292 = vmatpush1.bf16.msra.mxu0 %v965
        %1293 = vmatprep.subr.bf16.mxu0 %v970
        %1294 = vmatpush1.bf16.msra.mxu0 %v969
        %1295 = vmatprep.subr.bf16.mxu0 %v974
        %1296 = vmatpush1.bf16.msra.mxu0 %v973
        %1297 = vmatprep.subr.bf16.mxu0 %v978
        %1298 = vmatpush1.bf16.msra.mxu0 %v977
        %1299 = vmatprep.subr.bf16.mxu0 %v982
        %1300 = vmatpush1.bf16.msra.mxu0 %v981
        %1301 = vmatprep.subr.bf16.mxu0 %v986
        %1302 = vmatpush1.bf16.msra.mxu0 %v985
        %1303 = vmatprep.subr.bf16.mxu0 %v990
        %1304 = vmatpush1.bf16.msra.mxu0 %v989
        %1305 = vmatprep.subr.bf16.mxu0 %v994
        %1306 = vmatpush1.bf16.msra.mxu0 %v993
        %1307 = vmatprep.subr.bf16.mxu0 %v998
        %1308 = vmatpush1.bf16.msra.mxu0 %v997
        %1309 = vmatprep.mubr.bf16.mxu0 %v544
        %1310 = vmatmul.mubr.bf16.gmra.mrb[0].mxu0 %v543
        %v1311 = vpop.f32.mrb[0].mxu0
        %v1312 = vadd.f32 %v522, %v1311
        %v1313 = vpop.f32.mrb[0].mxu0
        %v1314 = vadd.f32 %v526, %v1313
        %v1315 = vpop.f32.mrb[0].mxu0
        %v1316 = vadd.f32 %v522, %v1315
        %v1317 = vpop.f32.mrb[0].mxu0
        %v1318 = vadd.f32 %v526, %v1317
        %1319 = vdwg.mxu0
        %1320 = vmatprep.subr.bf16.mxu0 %v1002
        %1321 = vmatpush1.bf16.msra.mxu0 %v1001
        %1322 = vmatprep.subr.bf16.mxu0 %v1006
        %1323 = vmatpush1.bf16.msra.mxu0 %v1005
        %1324 = vmatprep.subr.bf16.mxu0 %v1010
        %1325 = vmatpush1.bf16.msra.mxu0 %v1009
        %1326 = vmatprep.subr.bf16.mxu0 %v1014
        %1327 = vmatpush1.bf16.msra.mxu0 %v1013
        %1328 = vmatprep.subr.bf16.mxu0 %v1018
        %1329 = vmatpush1.bf16.msra.mxu0 %v1017
        %1330 = vmatprep.subr.bf16.mxu0 %v1022
        %1331 = vmatpush1.bf16.msra.mxu0 %v1021
        %1332 = vmatprep.subr.bf16.mxu0 %v1026
        %1333 = vmatpush1.bf16.msra.mxu0 %v1025
        %1334 = vmatprep.subr.bf16.mxu0 %v1030
        %1335 = vmatpush1.bf16.msra.mxu0 %v1029
        %1336 = vmatprep.subr.bf16.mxu0 %v1034
        %1337 = vmatpush1.bf16.msra.mxu0 %v1033
        %1338 = vmatprep.subr.bf16.mxu0 %v1038
        %1339 = vmatpush1.bf16.msra.mxu0 %v1037
        %1340 = vmatprep.subr.bf16.mxu0 %v1042
        %1341 = vmatpush1.bf16.msra.mxu0 %v1041
        %1342 = vmatprep.subr.bf16.mxu0 %v1046
        %1343 = vmatpush1.bf16.msra.mxu0 %v1045
        %1344 = vmatprep.subr.bf16.mxu0 %v1050
        %1345 = vmatpush1.bf16.msra.mxu0 %v1049
        %1346 = vmatprep.subr.bf16.mxu0 %v1054
        %1347 = vmatpush1.bf16.msra.mxu0 %v1053
        %1348 = vmatprep.subr.bf16.mxu0 %v1058
        %1349 = vmatpush1.bf16.msra.mxu0 %v1057
        %1350 = vmatprep.subr.bf16.mxu0 %v1062
        %1351 = vmatpush1.bf16.msra.mxu0 %v1061
        %1352 = vmatprep.mubr.bf16.mxu0 %v546
        %1353 = vmatmul.mubr.bf16.gmra.mrb[0].mxu0 %v545
        %v1354 = vpop.f32.mrb[0].mxu0
        %v1355 = vadd.f32 %v1312, %v1354
        %v1356 = vpop.f32.mrb[0].mxu0
        %v1357 = vadd.f32 %v1314, %v1356
        %v1358 = vpop.f32.mrb[0].mxu0
        %v1359 = vadd.f32 %v1316, %v1358
        %v1360 = vpop.f32.mrb[0].mxu0
        %v1361 = vadd.f32 %v1318, %v1360
        %1362 = vdwg.mxu0
        %v1363 = vmax.f32 %v1269, 0.0
        %v1364 = vmax.f32 %v1271, 0.0
        %v1365 = vmax.f32 %v1355, 0.0
        %v1366 = vmax.f32 %v1357, 0.0
        %v1367 = vmax.f32 %v1273, 0.0
        %v1368 = vmax.f32 %v1275, 0.0
        %v1369 = vmax.f32 %v1359, 0.0
        %v1370 = vmax.f32 %v1361, 0.0
        %v1371 = vld [vmem:[#allocation2] sm:$0xff]
        %v1372 = vld [vmem:[#allocation2 + $0x8] sm:$0xff]
        %v1373 = vld [vmem:[#allocation2 + $0x10] sm:$0xff]
        %v1374 = vld [vmem:[#allocation2 + $0x18] sm:$0xff]
        %v1375 = vld [vmem:[#allocation2 + $0x20] sm:$0xff]
        %v1376 = vld [vmem:[#allocation2 + $0x28] sm:$0xff]
        %v1377 = vld [vmem:[#allocation2 + $0x30] sm:$0xff]
        %v1378 = vld [vmem:[#allocation2 + $0x38] sm:$0xff]
        %v1379 = vpack.c.bf16 %v1367, %v1363
        %v1380 = vpack.c.bf16 %v1368, %v1364
        %v1381 = vpack.c.bf16 %v1369, %v1365
        %v1382 = vpack.c.bf16 %v1370, %v1366
        %v1383 = vld [vmem:[%s324] sm:$0xff]
        %v1384 = vld [vmem:[%s324 + $0x8] sm:$0xff]
        %v1385 = vld [vmem:[%s324 + $0x10] sm:$0xff]
        %v1386 = vld [vmem:[%s324 + $0x18] sm:$0xff]
        %v1387 = vld [vmem:[%s324 + $0x20] sm:$0xff]
        %v1388 = vld [vmem:[%s324 + $0x28] sm:$0xff]
        %v1389 = vld [vmem:[%s324 + $0x30] sm:$0xff]
        %v1390 = vld [vmem:[%s324 + $0x38] sm:$0xff]
        %v1391 = vld [vmem:[%s324 + $0x40] sm:$0xff]
        %v1392 = vld [vmem:[%s324 + $0x48] sm:$0xff]
        %v1393 = vld [vmem:[%s324 + $0x50] sm:$0xff]
        %v1394 = vld [vmem:[%s324 + $0x58] sm:$0xff]
        %v1395 = vld [vmem:[%s324 + $0x60] sm:$0xff]
        %v1396 = vld [vmem:[%s324 + $0x68] sm:$0xff]
        %v1397 = vld [vmem:[%s324 + $0x70] sm:$0xff]
        %v1398 = vld [vmem:[%s324 + $0x78] sm:$0xff]
        %v1399 = vld [vmem:[%s324 + $0x80] sm:$0xff]
        %v1400 = vld [vmem:[%s324 + $0x88] sm:$0xff]
        %v1401 = vld [vmem:[%s324 + $0x90] sm:$0xff]
        %v1402 = vld [vmem:[%s324 + $0x98] sm:$0xff]
        %v1403 = vld [vmem:[%s324 + $0xa0] sm:$0xff]
        %v1404 = vld [vmem:[%s324 + $0xa8] sm:$0xff]
        %v1405 = vld [vmem:[%s324 + $0xb0] sm:$0xff]
        %v1406 = vld [vmem:[%s324 + $0xb8] sm:$0xff]
        %v1407 = vld [vmem:[%s324 + $0xc0] sm:$0xff]
        %v1408 = vld [vmem:[%s324 + $0xc8] sm:$0xff]
        %v1409 = vld [vmem:[%s324 + $0xd0] sm:$0xff]
        %v1410 = vld [vmem:[%s324 + $0xd8] sm:$0xff]
        %v1411 = vld [vmem:[%s324 + $0xe0] sm:$0xff]
        %v1412 = vld [vmem:[%s324 + $0xe8] sm:$0xff]
        %v1413 = vld [vmem:[%s324 + $0xf0] sm:$0xff]
        %v1414 = vld [vmem:[%s324 + $0xf8] sm:$0xff]
        %v1415 = vld [vmem:[%s324 + $0x100] sm:$0xff]
        %v1416 = vld [vmem:[%s324 + $0x108] sm:$0xff]
        %v1417 = vld [vmem:[%s324 + $0x110] sm:$0xff]
        %v1418 = vld [vmem:[%s324 + $0x118] sm:$0xff]
        %v1419 = vld [vmem:[%s324 + $0x120] sm:$0xff]
        %v1420 = vld [vmem:[%s324 + $0x128] sm:$0xff]
        %v1421 = vld [vmem:[%s324 + $0x130] sm:$0xff]
        %v1422 = vld [vmem:[%s324 + $0x138] sm:$0xff]
        %v1423 = vld [vmem:[%s324 + $0x140] sm:$0xff]
        %v1424 = vld [vmem:[%s324 + $0x148] sm:$0xff]
        %v1425 = vld [vmem:[%s324 + $0x150] sm:$0xff]
        %v1426 = vld [vmem:[%s324 + $0x158] sm:$0xff]
        %v1427 = vld [vmem:[%s324 + $0x160] sm:$0xff]
        %v1428 = vld [vmem:[%s324 + $0x168] sm:$0xff]
        %v1429 = vld [vmem:[%s324 + $0x170] sm:$0xff]
        %v1430 = vld [vmem:[%s324 + $0x178] sm:$0xff]
        %v1431 = vld [vmem:[%s324 + $0x180] sm:$0xff]
        %v1432 = vld [vmem:[%s324 + $0x188] sm:$0xff]
        %v1433 = vld [vmem:[%s324 + $0x190] sm:$0xff]
        %v1434 = vld [vmem:[%s324 + $0x198] sm:$0xff]
        %v1435 = vld [vmem:[%s324 + $0x1a0] sm:$0xff]
        %v1436 = vld [vmem:[%s324 + $0x1a8] sm:$0xff]
        %v1437 = vld [vmem:[%s324 + $0x1b0] sm:$0xff]
        %v1438 = vld [vmem:[%s324 + $0x1b8] sm:$0xff]
        %v1439 = vld [vmem:[%s324 + $0x1c0] sm:$0xff]
        %v1440 = vld [vmem:[%s324 + $0x1c8] sm:$0xff]
        %v1441 = vld [vmem:[%s324 + $0x1d0] sm:$0xff]
        %v1442 = vld [vmem:[%s324 + $0x1d8] sm:$0xff]
        %v1443 = vld [vmem:[%s324 + $0x1e0] sm:$0xff]
        %v1444 = vld [vmem:[%s324 + $0x1e8] sm:$0xff]
        %v1445 = vld [vmem:[%s324 + $0x1f0] sm:$0xff]
        %v1446 = vld [vmem:[%s324 + $0x1f8] sm:$0xff]
        %v1447 = vld [vmem:[%s324 + $0x200] sm:$0xff]
        %v1448 = vld [vmem:[%s324 + $0x208] sm:$0xff]
        %v1449 = vld [vmem:[%s324 + $0x210] sm:$0xff]
        %v1450 = vld [vmem:[%s324 + $0x218] sm:$0xff]
        %v1451 = vld [vmem:[%s324 + $0x220] sm:$0xff]
        %v1452 = vld [vmem:[%s324 + $0x228] sm:$0xff]
        %v1453 = vld [vmem:[%s324 + $0x230] sm:$0xff]
        %v1454 = vld [vmem:[%s324 + $0x238] sm:$0xff]
        %v1455 = vld [vmem:[%s324 + $0x240] sm:$0xff]
        %v1456 = vld [vmem:[%s324 + $0x248] sm:$0xff]
        %v1457 = vld [vmem:[%s324 + $0x250] sm:$0xff]
        %v1458 = vld [vmem:[%s324 + $0x258] sm:$0xff]
        %v1459 = vld [vmem:[%s324 + $0x260] sm:$0xff]
        %v1460 = vld [vmem:[%s324 + $0x268] sm:$0xff]
        %v1461 = vld [vmem:[%s324 + $0x270] sm:$0xff]
        %v1462 = vld [vmem:[%s324 + $0x278] sm:$0xff]
        %v1463 = vld [vmem:[%s324 + $0x280] sm:$0xff]
        %v1464 = vld [vmem:[%s324 + $0x288] sm:$0xff]
        %v1465 = vld [vmem:[%s324 + $0x290] sm:$0xff]
        %v1466 = vld [vmem:[%s324 + $0x298] sm:$0xff]
        %v1467 = vld [vmem:[%s324 + $0x2a0] sm:$0xff]
        %v1468 = vld [vmem:[%s324 + $0x2a8] sm:$0xff]
        %v1469 = vld [vmem:[%s324 + $0x2b0] sm:$0xff]
        %v1470 = vld [vmem:[%s324 + $0x2b8] sm:$0xff]
        %v1471 = vld [vmem:[%s324 + $0x2c0] sm:$0xff]
        %v1472 = vld [vmem:[%s324 + $0x2c8] sm:$0xff]
        %v1473 = vld [vmem:[%s324 + $0x2d0] sm:$0xff]
        %v1474 = vld [vmem:[%s324 + $0x2d8] sm:$0xff]
        %v1475 = vld [vmem:[%s324 + $0x2e0] sm:$0xff]
        %v1476 = vld [vmem:[%s324 + $0x2e8] sm:$0xff]
        %v1477 = vld [vmem:[%s324 + $0x2f0] sm:$0xff]
        %v1478 = vld [vmem:[%s324 + $0x2f8] sm:$0xff]
        %v1479 = vld [vmem:[%s324 + $0x300] sm:$0xff]
        %v1480 = vld [vmem:[%s324 + $0x308] sm:$0xff]
        %v1481 = vld [vmem:[%s324 + $0x310] sm:$0xff]
        %v1482 = vld [vmem:[%s324 + $0x318] sm:$0xff]
        %v1483 = vld [vmem:[%s324 + $0x320] sm:$0xff]
        %v1484 = vld [vmem:[%s324 + $0x328] sm:$0xff]
        %v1485 = vld [vmem:[%s324 + $0x330] sm:$0xff]
        %v1486 = vld [vmem:[%s324 + $0x338] sm:$0xff]
        %v1487 = vld [vmem:[%s324 + $0x340] sm:$0xff]
        %v1488 = vld [vmem:[%s324 + $0x348] sm:$0xff]
        %v1489 = vld [vmem:[%s324 + $0x350] sm:$0xff]
        %v1490 = vld [vmem:[%s324 + $0x358] sm:$0xff]
        %v1491 = vld [vmem:[%s324 + $0x360] sm:$0xff]
        %v1492 = vld [vmem:[%s324 + $0x368] sm:$0xff]
        %v1493 = vld [vmem:[%s324 + $0x370] sm:$0xff]
        %v1494 = vld [vmem:[%s324 + $0x378] sm:$0xff]
        %v1495 = vld [vmem:[%s324 + $0x380] sm:$0xff]
        %v1496 = vld [vmem:[%s324 + $0x388] sm:$0xff]
        %v1497 = vld [vmem:[%s324 + $0x390] sm:$0xff]
        %v1498 = vld [vmem:[%s324 + $0x398] sm:$0xff]
        %v1499 = vld [vmem:[%s324 + $0x3a0] sm:$0xff]
        %v1500 = vld [vmem:[%s324 + $0x3a8] sm:$0xff]
        %v1501 = vld [vmem:[%s324 + $0x3b0] sm:$0xff]
        %v1502 = vld [vmem:[%s324 + $0x3b8] sm:$0xff]
        %v1503 = vld [vmem:[%s324 + $0x3c0] sm:$0xff]
        %v1504 = vld [vmem:[%s324 + $0x3c8] sm:$0xff]
        %v1505 = vld [vmem:[%s324 + $0x3d0] sm:$0xff]
        %v1506 = vld [vmem:[%s324 + $0x3d8] sm:$0xff]
        %v1507 = vld [vmem:[%s324 + $0x3e0] sm:$0xff]
        %v1508 = vld [vmem:[%s324 + $0x3e8] sm:$0xff]
        %v1509 = vld [vmem:[%s324 + $0x3f0] sm:$0xff]
        %v1510 = vld [vmem:[%s324 + $0x3f8] sm:$0xff]
        %v1639 = vunpack.c.l.b16 %v1383
        %v1640 = vunpack.c.h.b16 %v1383
        %v1641 = vunpack.c.l.b16 %v1384
        %v1642 = vunpack.c.h.b16 %v1384
        %v1643 = vunpack.c.l.b16 %v1385
        %v1644 = vunpack.c.h.b16 %v1385
        %v1645 = vunpack.c.l.b16 %v1386
        %v1646 = vunpack.c.h.b16 %v1386
        %v1647 = vunpack.c.l.b16 %v1387
        %v1648 = vunpack.c.h.b16 %v1387
        %v1649 = vunpack.c.l.b16 %v1388
        %v1650 = vunpack.c.h.b16 %v1388
        %v1651 = vunpack.c.l.b16 %v1389
        %v1652 = vunpack.c.h.b16 %v1389
        %v1653 = vunpack.c.l.b16 %v1390
        %v1654 = vunpack.c.h.b16 %v1390
        %v1655 = vunpack.c.l.b16 %v1391
        %v1656 = vunpack.c.h.b16 %v1391
        %v1657 = vunpack.c.l.b16 %v1392
        %v1658 = vunpack.c.h.b16 %v1392
        %v1659 = vunpack.c.l.b16 %v1393
        %v1660 = vunpack.c.h.b16 %v1393
        %v1661 = vunpack.c.l.b16 %v1394
        %v1662 = vunpack.c.h.b16 %v1394
        %v1663 = vunpack.c.l.b16 %v1395
        %v1664 = vunpack.c.h.b16 %v1395
        %v1665 = vunpack.c.l.b16 %v1396
        %v1666 = vunpack.c.h.b16 %v1396
        %v1667 = vunpack.c.l.b16 %v1397
        %v1668 = vunpack.c.h.b16 %v1397
        %v1669 = vunpack.c.l.b16 %v1398
        %v1670 = vunpack.c.h.b16 %v1398
        %v1671 = vunpack.c.l.b16 %v1399
        %v1672 = vunpack.c.h.b16 %v1399
        %v1673 = vunpack.c.l.b16 %v1400
        %v1674 = vunpack.c.h.b16 %v1400
        %v1675 = vunpack.c.l.b16 %v1401
        %v1676 = vunpack.c.h.b16 %v1401
        %v1677 = vunpack.c.l.b16 %v1402
        %v1678 = vunpack.c.h.b16 %v1402
        %v1679 = vunpack.c.l.b16 %v1403
        %v1680 = vunpack.c.h.b16 %v1403
        %v1681 = vunpack.c.l.b16 %v1404
        %v1682 = vunpack.c.h.b16 %v1404
        %v1683 = vunpack.c.l.b16 %v1405
        %v1684 = vunpack.c.h.b16 %v1405
        %v1685 = vunpack.c.l.b16 %v1406
        %v1686 = vunpack.c.h.b16 %v1406
        %v1687 = vunpack.c.l.b16 %v1407
        %v1688 = vunpack.c.h.b16 %v1407
        %v1689 = vunpack.c.l.b16 %v1408
        %v1690 = vunpack.c.h.b16 %v1408
        %v1691 = vunpack.c.l.b16 %v1409
        %v1692 = vunpack.c.h.b16 %v1409
        %v1693 = vunpack.c.l.b16 %v1410
        %v1694 = vunpack.c.h.b16 %v1410
        %v1695 = vunpack.c.l.b16 %v1411
        %v1696 = vunpack.c.h.b16 %v1411
        %v1697 = vunpack.c.l.b16 %v1412
        %v1698 = vunpack.c.h.b16 %v1412
        %v1699 = vunpack.c.l.b16 %v1413
        %v1700 = vunpack.c.h.b16 %v1413
        %v1701 = vunpack.c.l.b16 %v1414
        %v1702 = vunpack.c.h.b16 %v1414
        %v1703 = vunpack.c.l.b16 %v1415
        %v1704 = vunpack.c.h.b16 %v1415
        %v1705 = vunpack.c.l.b16 %v1416
        %v1706 = vunpack.c.h.b16 %v1416
        %v1707 = vunpack.c.l.b16 %v1417
        %v1708 = vunpack.c.h.b16 %v1417
        %v1709 = vunpack.c.l.b16 %v1418
        %v1710 = vunpack.c.h.b16 %v1418
        %v1711 = vunpack.c.l.b16 %v1419
        %v1712 = vunpack.c.h.b16 %v1419
        %v1713 = vunpack.c.l.b16 %v1420
        %v1714 = vunpack.c.h.b16 %v1420
        %v1715 = vunpack.c.l.b16 %v1421
        %v1716 = vunpack.c.h.b16 %v1421
        %v1717 = vunpack.c.l.b16 %v1422
        %v1718 = vunpack.c.h.b16 %v1422
        %v1719 = vunpack.c.l.b16 %v1423
        %v1720 = vunpack.c.h.b16 %v1423
        %v1721 = vunpack.c.l.b16 %v1424
        %v1722 = vunpack.c.h.b16 %v1424
        %v1723 = vunpack.c.l.b16 %v1425
        %v1724 = vunpack.c.h.b16 %v1425
        %v1725 = vunpack.c.l.b16 %v1426
        %v1726 = vunpack.c.h.b16 %v1426
        %v1727 = vunpack.c.l.b16 %v1427
        %v1728 = vunpack.c.h.b16 %v1427
        %v1729 = vunpack.c.l.b16 %v1428
        %v1730 = vunpack.c.h.b16 %v1428
        %v1731 = vunpack.c.l.b16 %v1429
        %v1732 = vunpack.c.h.b16 %v1429
        %v1733 = vunpack.c.l.b16 %v1430
        %v1734 = vunpack.c.h.b16 %v1430
        %v1735 = vunpack.c.l.b16 %v1431
        %v1736 = vunpack.c.h.b16 %v1431
        %v1737 = vunpack.c.l.b16 %v1432
        %v1738 = vunpack.c.h.b16 %v1432
        %v1739 = vunpack.c.l.b16 %v1433
        %v1740 = vunpack.c.h.b16 %v1433
        %v1741 = vunpack.c.l.b16 %v1434
        %v1742 = vunpack.c.h.b16 %v1434
        %v1743 = vunpack.c.l.b16 %v1435
        %v1744 = vunpack.c.h.b16 %v1435
        %v1745 = vunpack.c.l.b16 %v1436
        %v1746 = vunpack.c.h.b16 %v1436
        %v1747 = vunpack.c.l.b16 %v1437
        %v1748 = vunpack.c.h.b16 %v1437
        %v1749 = vunpack.c.l.b16 %v1438
        %v1750 = vunpack.c.h.b16 %v1438
        %v1751 = vunpack.c.l.b16 %v1439
        %v1752 = vunpack.c.h.b16 %v1439
        %v1753 = vunpack.c.l.b16 %v1440
        %v1754 = vunpack.c.h.b16 %v1440
        %v1755 = vunpack.c.l.b16 %v1441
        %v1756 = vunpack.c.h.b16 %v1441
        %v1757 = vunpack.c.l.b16 %v1442
        %v1758 = vunpack.c.h.b16 %v1442
        %v1759 = vunpack.c.l.b16 %v1443
        %v1760 = vunpack.c.h.b16 %v1443
        %v1761 = vunpack.c.l.b16 %v1444
        %v1762 = vunpack.c.h.b16 %v1444
        %v1763 = vunpack.c.l.b16 %v1445
        %v1764 = vunpack.c.h.b16 %v1445
        %v1765 = vunpack.c.l.b16 %v1446
        %v1766 = vunpack.c.h.b16 %v1446
        %v1767 = vunpack.c.l.b16 %v1447
        %v1768 = vunpack.c.h.b16 %v1447
        %v1769 = vunpack.c.l.b16 %v1448
        %v1770 = vunpack.c.h.b16 %v1448
        %v1771 = vunpack.c.l.b16 %v1449
        %v1772 = vunpack.c.h.b16 %v1449
        %v1773 = vunpack.c.l.b16 %v1450
        %v1774 = vunpack.c.h.b16 %v1450
        %v1775 = vunpack.c.l.b16 %v1451
        %v1776 = vunpack.c.h.b16 %v1451
        %v1777 = vunpack.c.l.b16 %v1452
        %v1778 = vunpack.c.h.b16 %v1452
        %v1779 = vunpack.c.l.b16 %v1453
        %v1780 = vunpack.c.h.b16 %v1453
        %v1781 = vunpack.c.l.b16 %v1454
        %v1782 = vunpack.c.h.b16 %v1454
        %v1783 = vunpack.c.l.b16 %v1455
        %v1784 = vunpack.c.h.b16 %v1455
        %v1785 = vunpack.c.l.b16 %v1456
        %v1786 = vunpack.c.h.b16 %v1456
        %v1787 = vunpack.c.l.b16 %v1457
        %v1788 = vunpack.c.h.b16 %v1457
        %v1789 = vunpack.c.l.b16 %v1458
        %v1790 = vunpack.c.h.b16 %v1458
        %v1791 = vunpack.c.l.b16 %v1459
        %v1792 = vunpack.c.h.b16 %v1459
        %v1793 = vunpack.c.l.b16 %v1460
        %v1794 = vunpack.c.h.b16 %v1460
        %v1795 = vunpack.c.l.b16 %v1461
        %v1796 = vunpack.c.h.b16 %v1461
        %v1797 = vunpack.c.l.b16 %v1462
        %v1798 = vunpack.c.h.b16 %v1462
        %v1799 = vunpack.c.l.b16 %v1463
        %v1800 = vunpack.c.h.b16 %v1463
        %v1801 = vunpack.c.l.b16 %v1464
        %v1802 = vunpack.c.h.b16 %v1464
        %v1803 = vunpack.c.l.b16 %v1465
        %v1804 = vunpack.c.h.b16 %v1465
        %v1805 = vunpack.c.l.b16 %v1466
        %v1806 = vunpack.c.h.b16 %v1466
        %v1807 = vunpack.c.l.b16 %v1467
        %v1808 = vunpack.c.h.b16 %v1467
        %v1809 = vunpack.c.l.b16 %v1468
        %v1810 = vunpack.c.h.b16 %v1468
        %v1811 = vunpack.c.l.b16 %v1469
        %v1812 = vunpack.c.h.b16 %v1469
        %v1813 = vunpack.c.l.b16 %v1470
        %v1814 = vunpack.c.h.b16 %v1470
        %v1815 = vunpack.c.l.b16 %v1471
        %v1816 = vunpack.c.h.b16 %v1471
        %v1817 = vunpack.c.l.b16 %v1472
        %v1818 = vunpack.c.h.b16 %v1472
        %v1819 = vunpack.c.l.b16 %v1473
        %v1820 = vunpack.c.h.b16 %v1473
        %v1821 = vunpack.c.l.b16 %v1474
        %v1822 = vunpack.c.h.b16 %v1474
        %v1823 = vunpack.c.l.b16 %v1475
        %v1824 = vunpack.c.h.b16 %v1475
        %v1825 = vunpack.c.l.b16 %v1476
        %v1826 = vunpack.c.h.b16 %v1476
        %v1827 = vunpack.c.l.b16 %v1477
        %v1828 = vunpack.c.h.b16 %v1477
        %v1829 = vunpack.c.l.b16 %v1478
        %v1830 = vunpack.c.h.b16 %v1478
        %v1831 = vunpack.c.l.b16 %v1479
        %v1832 = vunpack.c.h.b16 %v1479
        %v1833 = vunpack.c.l.b16 %v1480
        %v1834 = vunpack.c.h.b16 %v1480
        %v1835 = vunpack.c.l.b16 %v1481
        %v1836 = vunpack.c.h.b16 %v1481
        %v1837 = vunpack.c.l.b16 %v1482
        %v1838 = vunpack.c.h.b16 %v1482
        %v1839 = vunpack.c.l.b16 %v1483
        %v1840 = vunpack.c.h.b16 %v1483
        %v1841 = vunpack.c.l.b16 %v1484
        %v1842 = vunpack.c.h.b16 %v1484
        %v1843 = vunpack.c.l.b16 %v1485
        %v1844 = vunpack.c.h.b16 %v1485
        %v1845 = vunpack.c.l.b16 %v1486
        %v1846 = vunpack.c.h.b16 %v1486
        %v1847 = vunpack.c.l.b16 %v1487
        %v1848 = vunpack.c.h.b16 %v1487
        %v1849 = vunpack.c.l.b16 %v1488
        %v1850 = vunpack.c.h.b16 %v1488
        %v1851 = vunpack.c.l.b16 %v1489
        %v1852 = vunpack.c.h.b16 %v1489
        %v1853 = vunpack.c.l.b16 %v1490
        %v1854 = vunpack.c.h.b16 %v1490
        %v1855 = vunpack.c.l.b16 %v1491
        %v1856 = vunpack.c.h.b16 %v1491
        %v1857 = vunpack.c.l.b16 %v1492
        %v1858 = vunpack.c.h.b16 %v1492
        %v1859 = vunpack.c.l.b16 %v1493
        %v1860 = vunpack.c.h.b16 %v1493
        %v1861 = vunpack.c.l.b16 %v1494
        %v1862 = vunpack.c.h.b16 %v1494
        %v1863 = vunpack.c.l.b16 %v1495
        %v1864 = vunpack.c.h.b16 %v1495
        %v1865 = vunpack.c.l.b16 %v1496
        %v1866 = vunpack.c.h.b16 %v1496
        %v1867 = vunpack.c.l.b16 %v1497
        %v1868 = vunpack.c.h.b16 %v1497
        %v1869 = vunpack.c.l.b16 %v1498
        %v1870 = vunpack.c.h.b16 %v1498
        %v1871 = vunpack.c.l.b16 %v1499
        %v1872 = vunpack.c.h.b16 %v1499
        %v1873 = vunpack.c.l.b16 %v1500
        %v1874 = vunpack.c.h.b16 %v1500
        %v1875 = vunpack.c.l.b16 %v1501
        %v1876 = vunpack.c.h.b16 %v1501
        %v1877 = vunpack.c.l.b16 %v1502
        %v1878 = vunpack.c.h.b16 %v1502
        %v1879 = vunpack.c.l.b16 %v1503
        %v1880 = vunpack.c.h.b16 %v1503
        %v1881 = vunpack.c.l.b16 %v1504
        %v1882 = vunpack.c.h.b16 %v1504
        %v1883 = vunpack.c.l.b16 %v1505
        %v1884 = vunpack.c.h.b16 %v1505
        %v1885 = vunpack.c.l.b16 %v1506
        %v1886 = vunpack.c.h.b16 %v1506
        %v1887 = vunpack.c.l.b16 %v1507
        %v1888 = vunpack.c.h.b16 %v1507
        %v1889 = vunpack.c.l.b16 %v1508
        %v1890 = vunpack.c.h.b16 %v1508
        %v1891 = vunpack.c.l.b16 %v1509
        %v1892 = vunpack.c.h.b16 %v1509
        %v1893 = vunpack.c.l.b16 %v1510
        %v1894 = vunpack.c.h.b16 %v1510
        %v1895 = vpack.c.b16 %v1643, %v1639
        %v1896 = vpack.c.b16 %v1644, %v1640
        %v1897 = vpack.c.b16 %v1645, %v1641
        %v1898 = vpack.c.b16 %v1646, %v1642
        %v1899 = vpack.c.b16 %v1651, %v1647
        %v1900 = vpack.c.b16 %v1652, %v1648
        %v1901 = vpack.c.b16 %v1653, %v1649
        %v1902 = vpack.c.b16 %v1654, %v1650
        %v1903 = vpack.c.b16 %v1659, %v1655
        %v1904 = vpack.c.b16 %v1660, %v1656
        %v1905 = vpack.c.b16 %v1661, %v1657
        %v1906 = vpack.c.b16 %v1662, %v1658
        %v1907 = vpack.c.b16 %v1667, %v1663
        %v1908 = vpack.c.b16 %v1668, %v1664
        %v1909 = vpack.c.b16 %v1669, %v1665
        %v1910 = vpack.c.b16 %v1670, %v1666
        %v1911 = vpack.c.b16 %v1675, %v1671
        %v1912 = vpack.c.b16 %v1676, %v1672
        %v1913 = vpack.c.b16 %v1677, %v1673
        %v1914 = vpack.c.b16 %v1678, %v1674
        %v1915 = vpack.c.b16 %v1683, %v1679
        %v1916 = vpack.c.b16 %v1684, %v1680
        %v1917 = vpack.c.b16 %v1685, %v1681
        %v1918 = vpack.c.b16 %v1686, %v1682
        %v1919 = vpack.c.b16 %v1691, %v1687
        %v1920 = vpack.c.b16 %v1692, %v1688
        %v1921 = vpack.c.b16 %v1693, %v1689
        %v1922 = vpack.c.b16 %v1694, %v1690
        %v1923 = vpack.c.b16 %v1699, %v1695
        %v1924 = vpack.c.b16 %v1700, %v1696
        %v1925 = vpack.c.b16 %v1701, %v1697
        %v1926 = vpack.c.b16 %v1702, %v1698
        %v1927 = vpack.c.b16 %v1707, %v1703
        %v1928 = vpack.c.b16 %v1708, %v1704
        %v1929 = vpack.c.b16 %v1709, %v1705
        %v1930 = vpack.c.b16 %v1710, %v1706
        %v1931 = vpack.c.b16 %v1715, %v1711
        %v1932 = vpack.c.b16 %v1716, %v1712
        %v1933 = vpack.c.b16 %v1717, %v1713
        %v1934 = vpack.c.b16 %v1718, %v1714
        %v1935 = vpack.c.b16 %v1723, %v1719
        %v1936 = vpack.c.b16 %v1724, %v1720
        %v1937 = vpack.c.b16 %v1725, %v1721
        %v1938 = vpack.c.b16 %v1726, %v1722
        %v1939 = vpack.c.b16 %v1731, %v1727
        %v1940 = vpack.c.b16 %v1732, %v1728
        %v1941 = vpack.c.b16 %v1733, %v1729
        %v1942 = vpack.c.b16 %v1734, %v1730
        %v1943 = vpack.c.b16 %v1739, %v1735
        %v1944 = vpack.c.b16 %v1740, %v1736
        %v1945 = vpack.c.b16 %v1741, %v1737
        %v1946 = vpack.c.b16 %v1742, %v1738
        %v1947 = vpack.c.b16 %v1747, %v1743
        %v1948 = vpack.c.b16 %v1748, %v1744
        %v1949 = vpack.c.b16 %v1749, %v1745
        %v1950 = vpack.c.b16 %v1750, %v1746
        %v1951 = vpack.c.b16 %v1755, %v1751
        %v1952 = vpack.c.b16 %v1756, %v1752
        %v1953 = vpack.c.b16 %v1757, %v1753
        %v1954 = vpack.c.b16 %v1758, %v1754
        %v1955 = vpack.c.b16 %v1763, %v1759
        %v1956 = vpack.c.b16 %v1764, %v1760
        %v1957 = vpack.c.b16 %v1765, %v1761
        %v1958 = vpack.c.b16 %v1766, %v1762
        %v1959 = vpack.c.b16 %v1771, %v1767
        %v1960 = vpack.c.b16 %v1772, %v1768
        %v1961 = vpack.c.b16 %v1773, %v1769
        %v1962 = vpack.c.b16 %v1774, %v1770
        %v1963 = vpack.c.b16 %v1779, %v1775
        %v1964 = vpack.c.b16 %v1780, %v1776
        %v1965 = vpack.c.b16 %v1781, %v1777
        %v1966 = vpack.c.b16 %v1782, %v1778
        %v1967 = vpack.c.b16 %v1787, %v1783
        %v1968 = vpack.c.b16 %v1788, %v1784
        %v1969 = vpack.c.b16 %v1789, %v1785
        %v1970 = vpack.c.b16 %v1790, %v1786
        %v1971 = vpack.c.b16 %v1795, %v1791
        %v1972 = vpack.c.b16 %v1796, %v1792
        %v1973 = vpack.c.b16 %v1797, %v1793
        %v1974 = vpack.c.b16 %v1798, %v1794
        %v1975 = vpack.c.b16 %v1803, %v1799
        %v1976 = vpack.c.b16 %v1804, %v1800
        %v1977 = vpack.c.b16 %v1805, %v1801
        %v1978 = vpack.c.b16 %v1806, %v1802
        %v1979 = vpack.c.b16 %v1811, %v1807
        %v1980 = vpack.c.b16 %v1812, %v1808
        %v1981 = vpack.c.b16 %v1813, %v1809
        %v1982 = vpack.c.b16 %v1814, %v1810
        %v1983 = vpack.c.b16 %v1819, %v1815
        %v1984 = vpack.c.b16 %v1820, %v1816
        %v1985 = vpack.c.b16 %v1821, %v1817
        %v1986 = vpack.c.b16 %v1822, %v1818
        %v1987 = vpack.c.b16 %v1827, %v1823
        %v1988 = vpack.c.b16 %v1828, %v1824
        %v1989 = vpack.c.b16 %v1829, %v1825
        %v1990 = vpack.c.b16 %v1830, %v1826
        %v1991 = vpack.c.b16 %v1835, %v1831
        %v1992 = vpack.c.b16 %v1836, %v1832
        %v1993 = vpack.c.b16 %v1837, %v1833
        %v1994 = vpack.c.b16 %v1838, %v1834
        %v1995 = vpack.c.b16 %v1843, %v1839
        %v1996 = vpack.c.b16 %v1844, %v1840
        %v1997 = vpack.c.b16 %v1845, %v1841
        %v1998 = vpack.c.b16 %v1846, %v1842
        %v1999 = vpack.c.b16 %v1851, %v1847
        %v2000 = vpack.c.b16 %v1852, %v1848
        %v2001 = vpack.c.b16 %v1853, %v1849
        %v2002 = vpack.c.b16 %v1854, %v1850
        %v2003 = vpack.c.b16 %v1859, %v1855
        %v2004 = vpack.c.b16 %v1860, %v1856
        %v2005 = vpack.c.b16 %v1861, %v1857
        %v2006 = vpack.c.b16 %v1862, %v1858
        %v2007 = vpack.c.b16 %v1867, %v1863
        %v2008 = vpack.c.b16 %v1868, %v1864
        %v2009 = vpack.c.b16 %v1869, %v1865
        %v2010 = vpack.c.b16 %v1870, %v1866
        %v2011 = vpack.c.b16 %v1875, %v1871
        %v2012 = vpack.c.b16 %v1876, %v1872
        %v2013 = vpack.c.b16 %v1877, %v1873
        %v2014 = vpack.c.b16 %v1878, %v1874
        %v2015 = vpack.c.b16 %v1883, %v1879
        %v2016 = vpack.c.b16 %v1884, %v1880
        %v2017 = vpack.c.b16 %v1885, %v1881
        %v2018 = vpack.c.b16 %v1886, %v1882
        %v2019 = vpack.c.b16 %v1891, %v1887
        %v2020 = vpack.c.b16 %v1892, %v1888
        %v2021 = vpack.c.b16 %v1893, %v1889
        %v2022 = vpack.c.b16 %v1894, %v1890
        %2151 = vmatprep.subr.bf16.mxu0 %v1896
        %2152 = vmatpush1.bf16.msra.mxu0 %v1895
        %2153 = vmatprep.subr.bf16.mxu0 %v1900
        %2154 = vmatpush1.bf16.msra.mxu0 %v1899
        %2155 = vmatprep.subr.bf16.mxu0 %v1904
        %2156 = vmatpush1.bf16.msra.mxu0 %v1903
        %2157 = vmatprep.subr.bf16.mxu0 %v1908
        %2158 = vmatpush1.bf16.msra.mxu0 %v1907
        %2159 = vmatprep.subr.bf16.mxu0 %v1912
        %2160 = vmatpush1.bf16.msra.mxu0 %v1911
        %2161 = vmatprep.subr.bf16.mxu0 %v1916
        %2162 = vmatpush1.bf16.msra.mxu0 %v1915
        %2163 = vmatprep.subr.bf16.mxu0 %v1920
        %2164 = vmatpush1.bf16.msra.mxu0 %v1919
        %2165 = vmatprep.subr.bf16.mxu0 %v1924
        %2166 = vmatpush1.bf16.msra.mxu0 %v1923
        %2167 = vmatprep.subr.bf16.mxu0 %v1928
        %2168 = vmatpush1.bf16.msra.mxu0 %v1927
        %2169 = vmatprep.subr.bf16.mxu0 %v1932
        %2170 = vmatpush1.bf16.msra.mxu0 %v1931
        %2171 = vmatprep.subr.bf16.mxu0 %v1936
        %2172 = vmatpush1.bf16.msra.mxu0 %v1935
        %2173 = vmatprep.subr.bf16.mxu0 %v1940
        %2174 = vmatpush1.bf16.msra.mxu0 %v1939
        %2175 = vmatprep.subr.bf16.mxu0 %v1944
        %2176 = vmatpush1.bf16.msra.mxu0 %v1943
        %2177 = vmatprep.subr.bf16.mxu0 %v1948
        %2178 = vmatpush1.bf16.msra.mxu0 %v1947
        %2179 = vmatprep.subr.bf16.mxu0 %v1952
        %2180 = vmatpush1.bf16.msra.mxu0 %v1951
        %2181 = vmatprep.subr.bf16.mxu0 %v1956
        %2182 = vmatpush1.bf16.msra.mxu0 %v1955
        %2183 = vmatprep.mubr.bf16.mxu0 %v1380
        %2184 = vmatmul.mubr.bf16.gmra.mrb[0].mxu0 %v1379
        %v2185 = vpop.f32.mrb[0].mxu0
        %v2186 = vadd.f32 0.0, %v2185
        %v2187 = vpop.f32.mrb[0].mxu0
        %v2188 = vadd.f32 0.0, %v2187
        %v2189 = vpop.f32.mrb[0].mxu0
        %v2190 = vadd.f32 0.0, %v2189
        %v2191 = vpop.f32.mrb[0].mxu0
        %v2192 = vadd.f32 0.0, %v2191
        %2193 = vdwg.mxu0
        %2194 = vmatprep.subr.bf16.mxu0 %v1960
        %2195 = vmatpush1.bf16.msra.mxu0 %v1959
        %2196 = vmatprep.subr.bf16.mxu0 %v1964
        %2197 = vmatpush1.bf16.msra.mxu0 %v1963
        %2198 = vmatprep.subr.bf16.mxu0 %v1968
        %2199 = vmatpush1.bf16.msra.mxu0 %v1967
        %2200 = vmatprep.subr.bf16.mxu0 %v1972
        %2201 = vmatpush1.bf16.msra.mxu0 %v1971
        %2202 = vmatprep.subr.bf16.mxu0 %v1976
        %2203 = vmatpush1.bf16.msra.mxu0 %v1975
        %2204 = vmatprep.subr.bf16.mxu0 %v1980
        %2205 = vmatpush1.bf16.msra.mxu0 %v1979
        %2206 = vmatprep.subr.bf16.mxu0 %v1984
        %2207 = vmatpush1.bf16.msra.mxu0 %v1983
        %2208 = vmatprep.subr.bf16.mxu0 %v1988
        %2209 = vmatpush1.bf16.msra.mxu0 %v1987
        %2210 = vmatprep.subr.bf16.mxu0 %v1992
        %2211 = vmatpush1.bf16.msra.mxu0 %v1991
        %2212 = vmatprep.subr.bf16.mxu0 %v1996
        %2213 = vmatpush1.bf16.msra.mxu0 %v1995
        %2214 = vmatprep.subr.bf16.mxu0 %v2000
        %2215 = vmatpush1.bf16.msra.mxu0 %v1999
        %2216 = vmatprep.subr.bf16.mxu0 %v2004
        %2217 = vmatpush1.bf16.msra.mxu0 %v2003
        %2218 = vmatprep.subr.bf16.mxu0 %v2008
        %2219 = vmatpush1.bf16.msra.mxu0 %v2007
        %2220 = vmatprep.subr.bf16.mxu0 %v2012
        %2221 = vmatpush1.bf16.msra.mxu0 %v2011
        %2222 = vmatprep.subr.bf16.mxu0 %v2016
        %2223 = vmatpush1.bf16.msra.mxu0 %v2015
        %2224 = vmatprep.subr.bf16.mxu0 %v2020
        %2225 = vmatpush1.bf16.msra.mxu0 %v2019
        %2226 = vmatprep.mubr.bf16.mxu0 %v1382
        %2227 = vmatmul.mubr.bf16.gmra.mrb[0].mxu0 %v1381
        %v2228 = vpop.f32.mrb[0].mxu0
        %v2229 = vadd.f32 %v2186, %v2228
        %v2230 = vpop.f32.mrb[0].mxu0
        %v2231 = vadd.f32 %v2188, %v2230
        %v2232 = vpop.f32.mrb[0].mxu0
        %v2233 = vadd.f32 %v2190, %v2232
        %v2234 = vpop.f32.mrb[0].mxu0
        %v2235 = vadd.f32 %v2192, %v2234
        %2236 = vdwg.mxu0
        %2237 = vmatprep.subr.bf16.mxu0 %v1898
        %2238 = vmatpush1.bf16.msra.mxu0 %v1897
        %2239 = vmatprep.subr.bf16.mxu0 %v1902
        %2240 = vmatpush1.bf16.msra.mxu0 %v1901
        %2241 = vmatprep.subr.bf16.mxu0 %v1906
        %2242 = vmatpush1.bf16.msra.mxu0 %v1905
        %2243 = vmatprep.subr.bf16.mxu0 %v1910
        %2244 = vmatpush1.bf16.msra.mxu0 %v1909
        %2245 = vmatprep.subr.bf16.mxu0 %v1914
        %2246 = vmatpush1.bf16.msra.mxu0 %v1913
        %2247 = vmatprep.subr.bf16.mxu0 %v1918
        %2248 = vmatpush1.bf16.msra.mxu0 %v1917
        %2249 = vmatprep.subr.bf16.mxu0 %v1922
        %2250 = vmatpush1.bf16.msra.mxu0 %v1921
        %2251 = vmatprep.subr.bf16.mxu0 %v1926
        %2252 = vmatpush1.bf16.msra.mxu0 %v1925
        %2253 = vmatprep.subr.bf16.mxu0 %v1930
        %2254 = vmatpush1.bf16.msra.mxu0 %v1929
        %2255 = vmatprep.subr.bf16.mxu0 %v1934
        %2256 = vmatpush1.bf16.msra.mxu0 %v1933
        %2257 = vmatprep.subr.bf16.mxu0 %v1938
        %2258 = vmatpush1.bf16.msra.mxu0 %v1937
        %2259 = vmatprep.subr.bf16.mxu0 %v1942
        %2260 = vmatpush1.bf16.msra.mxu0 %v1941
        %2261 = vmatprep.subr.bf16.mxu0 %v1946
        %2262 = vmatpush1.bf16.msra.mxu0 %v1945
        %2263 = vmatprep.subr.bf16.mxu0 %v1950
        %2264 = vmatpush1.bf16.msra.mxu0 %v1949
        %2265 = vmatprep.subr.bf16.mxu0 %v1954
        %2266 = vmatpush1.bf16.msra.mxu0 %v1953
        %2267 = vmatprep.subr.bf16.mxu0 %v1958
        %2268 = vmatpush1.bf16.msra.mxu0 %v1957
        %2269 = vmatprep.mubr.bf16.mxu0 %v1380
        %2270 = vmatmul.mubr.bf16.gmra.mrb[0].mxu0 %v1379
        %v2271 = vpop.f32.mrb[0].mxu0
        %v2272 = vadd.f32 0.0, %v2271
        %v2273 = vpop.f32.mrb[0].mxu0
        %v2274 = vadd.f32 0.0, %v2273
        %v2275 = vpop.f32.mrb[0].mxu0
        %v2276 = vadd.f32 0.0, %v2275
        %v2277 = vpop.f32.mrb[0].mxu0
        %v2278 = vadd.f32 0.0, %v2277
        %2279 = vdwg.mxu0
        %2280 = vmatprep.subr.bf16.mxu0 %v1962
        %2281 = vmatpush1.bf16.msra.mxu0 %v1961
        %2282 = vmatprep.subr.bf16.mxu0 %v1966
        %2283 = vmatpush1.bf16.msra.mxu0 %v1965
        %2284 = vmatprep.subr.bf16.mxu0 %v1970
        %2285 = vmatpush1.bf16.msra.mxu0 %v1969
        %2286 = vmatprep.subr.bf16.mxu0 %v1974
        %2287 = vmatpush1.bf16.msra.mxu0 %v1973
        %2288 = vmatprep.subr.bf16.mxu0 %v1978
        %2289 = vmatpush1.bf16.msra.mxu0 %v1977
        %2290 = vmatprep.subr.bf16.mxu0 %v1982
        %2291 = vmatpush1.bf16.msra.mxu0 %v1981
        %2292 = vmatprep.subr.bf16.mxu0 %v1986
        %2293 = vmatpush1.bf16.msra.mxu0 %v1985
        %2294 = vmatprep.subr.bf16.mxu0 %v1990
        %2295 = vmatpush1.bf16.msra.mxu0 %v1989
        %2296 = vmatprep.subr.bf16.mxu0 %v1994
        %2297 = vmatpush1.bf16.msra.mxu0 %v1993
        %2298 = vmatprep.subr.bf16.mxu0 %v1998
        %2299 = vmatpush1.bf16.msra.mxu0 %v1997
        %2300 = vmatprep.subr.bf16.mxu0 %v2002
        %2301 = vmatpush1.bf16.msra.mxu0 %v2001
        %2302 = vmatprep.subr.bf16.mxu0 %v2006
        %2303 = vmatpush1.bf16.msra.mxu0 %v2005
        %2304 = vmatprep.subr.bf16.mxu0 %v2010
        %2305 = vmatpush1.bf16.msra.mxu0 %v2009
        %2306 = vmatprep.subr.bf16.mxu0 %v2014
        %2307 = vmatpush1.bf16.msra.mxu0 %v2013
        %2308 = vmatprep.subr.bf16.mxu0 %v2018
        %2309 = vmatpush1.bf16.msra.mxu0 %v2017
        %2310 = vmatprep.subr.bf16.mxu0 %v2022
        %2311 = vmatpush1.bf16.msra.mxu0 %v2021
        %2312 = vmatprep.mubr.bf16.mxu0 %v1382
        %2313 = vmatmul.mubr.bf16.gmra.mrb[0].mxu0 %v1381
        %v2314 = vpop.f32.mrb[0].mxu0
        %v2315 = vadd.f32 %v2272, %v2314
        %v2316 = vpop.f32.mrb[0].mxu0
        %v2317 = vadd.f32 %v2274, %v2316
        %v2318 = vpop.f32.mrb[0].mxu0
        %v2319 = vadd.f32 %v2276, %v2318
        %v2320 = vpop.f32.mrb[0].mxu0
        %v2321 = vadd.f32 %v2278, %v2320
        %2322 = vdwg.mxu0
        %v2323 = vadd.f32 %v1371, %v2229
        %v2324 = vadd.f32 %v1372, %v2231
        %v2325 = vadd.f32 %v1373, %v2315
        %v2326 = vadd.f32 %v1374, %v2317
        %v2327 = vadd.f32 %v1375, %v2233
        %v2328 = vadd.f32 %v1376, %v2235
        %v2329 = vadd.f32 %v1377, %v2319
        %v2330 = vadd.f32 %v1378, %v2321
        %2331 = vst [vmem:[#allocation2] sm:$0xff] %v2323
        %2332 = vst [vmem:[#allocation2 + $0x8] sm:$0xff] %v2324
        %2333 = vst [vmem:[#allocation2 + $0x10] sm:$0xff] %v2325
        %2334 = vst [vmem:[#allocation2 + $0x18] sm:$0xff] %v2326
        %2335 = vst [vmem:[#allocation2 + $0x20] sm:$0xff] %v2327
        %2336 = vst [vmem:[#allocation2 + $0x28] sm:$0xff] %v2328
        %2337 = vst [vmem:[#allocation2 + $0x30] sm:$0xff] %v2329
        %2338 = vst [vmem:[#allocation2 + $0x38] sm:$0xff] %v2330
        %p2339 = scmp.eq.s32.totalorder %s29, 3
        // Predicated region
        $region65: #{tpu_custom_call.1} parent=39 // pred_check
          %p2340 = pneg %p2339
        $region66: #{tpu_custom_call.1} parent=39 // pred_check_branch
          %2342 = sbr.rel (%p2340) target = $region68
        $region67: #{tpu_custom_call.1} parent=39 // pred_region
          %v2343 = vld [vmem:[#allocation2] sm:$0xff]
          %v2344 = vld [vmem:[#allocation2 + $0x8] sm:$0xff]
          %v2345 = vld [vmem:[#allocation2 + $0x10] sm:$0xff]
          %v2346 = vld [vmem:[#allocation2 + $0x18] sm:$0xff]
          %v2347 = vld [vmem:[#allocation2 + $0x20] sm:$0xff]
          %v2348 = vld [vmem:[#allocation2 + $0x28] sm:$0xff]
          %v2349 = vld [vmem:[#allocation2 + $0x30] sm:$0xff]
          %v2350 = vld [vmem:[#allocation2 + $0x38] sm:$0xff]
          %v2351 = vld [vmem:[#allocation11] sm:$0xf]
          %v2353 = vlaneseq
          %v2354 = vshrl.u32 %v2353, 7
          %v2355 = vsub.s32 0, %v2354
          %v2356 = vrot.slane %v2351, %v2355
          %v2357 = vlaneseq
          %v2358 = vshrl.u32 %v2357, 7
          %v2359 = vsub.s32 1, %v2358
          %v2360 = vrot.slane %v2351, %v2359
          %v2361 = vlaneseq
          %v2362 = vshrl.u32 %v2361, 7
          %v2363 = vsub.s32 2, %v2362
          %v2364 = vrot.slane %v2351, %v2363
          %v2365 = vlaneseq
          %v2366 = vshrl.u32 %v2365, 7
          %v2367 = vsub.s32 3, %v2366
          %v2368 = vrot.slane %v2351, %v2367
          %v2373 = vadd.f32 %v2343, %v2356
          %v2374 = vadd.f32 %v2344, %v2360
          %v2375 = vadd.f32 %v2345, %v2364
          %v2376 = vadd.f32 %v2346, %v2368
          %v2377 = vadd.f32 %v2347, %v2356
          %v2378 = vadd.f32 %v2348, %v2360
          %v2379 = vadd.f32 %v2349, %v2364
          %v2380 = vadd.f32 %v2350, %v2368
          %2381 = vst [vmem:[#allocation12] sm:$0xff] %v2373
          %2382 = vst [vmem:[#allocation12 + $0x8] sm:$0xff] %v2374
          %2383 = vst [vmem:[#allocation12 + $0x10] sm:$0xff] %v2375
          %2384 = vst [vmem:[#allocation12 + $0x18] sm:$0xff] %v2376
          %2385 = vst [vmem:[#allocation12 + $0x20] sm:$0xff] %v2377
          %2386 = vst [vmem:[#allocation12 + $0x28] sm:$0xff] %v2378
          %2387 = vst [vmem:[#allocation12 + $0x30] sm:$0xff] %v2379
          %2388 = vst [vmem:[#allocation12 + $0x38] sm:$0xff] %v2380
        $region68: #{tpu_custom_call.1} parent=39 // pred_fallthru
          _
        // Predicated region
        $region69: #{tpu_custom_call.1} parent=39 // pred_check
          %p2389 = pneg %p179
        $region70: #{tpu_custom_call.1} parent=39 // pred_check_branch
          %2391 = sbr.rel (%p2389) target = $region72
        $region71: #{tpu_custom_call.1} parent=39 // pred_region
          %s2392 = smul.u32 2, %s28
          %s2394 = ssub.s32 1024, 1024
          %2395 = vsyncadd [#allocation5], %s2394
          %s2396 = smul.addr %s2392, 4
          %s2397 = smul.addr %s2396, 128
          %s2398 = scalar_lea.hbm %s5, %s2397
          %s2399 = sshll.u32 [#allocation12], 4
          %s2400 = int_to_ptr.vmem [resolvable:$true] %s2399
          %2405 = dma.vmem_to_hbm [thread:$0]  %s2400, 1024, %s2398, [#allocation5], 512, 512, 32
        $region72: #{tpu_custom_call.1} parent=39 // pred_fallthru
          _
        // Predicated region
        $region73: #{tpu_custom_call.1} parent=39 // pred_check
          %p2406 = pneg %p179
        $region74: #{tpu_custom_call.1} parent=39 // pred_check_branch
          %2408 = sbr.rel (%p2406) target = $region76
        $region75: #{tpu_custom_call.1} parent=39 // pred_region
          %2409 = dma.done [#allocation5], 1024
        $region76: #{tpu_custom_call.1} parent=39 // pred_fallthru
          _
      $region40: #{tpu_custom_call.1} parent=5 // pred_fallthru
        _
      %p2410 = scmp.le.s32.totalorder 2, %s19
      // Predicated region
      $region77: #{tpu_custom_call.1} parent=5 // pred_check
        %p2411 = pneg %p2410
      $region78: #{tpu_custom_call.1} parent=5 // pred_check_branch
        %2413 = sbr.rel (%p2411) target = $region80
      $region79: #{tpu_custom_call.1} parent=5 // pred_region
        %s2414 = ssub.s32 %s19, 2
      $region80: #{tpu_custom_call.1} parent=5 // pred_fallthru
        _
    $region6: #{tpu_custom_call.1} parent=1 // loop_footer
      %s23 = sadd.s32 1, %s19
    $region7: #{tpu_custom_call.1} parent=1 // loop_footer_branch
      %18 = sbr.rel target = $region3
    $region8: #{tpu_custom_call.1} parent=1 // loop_exit
      _
    %2415 = vsyncpa [#allocation4], 1
    %s2416 = scalar_lea.sflag [#allocation4], 1
    %2417 = vsyncpa %s2416, 1
    %2418 = vsyncpa [#allocation7], 1
    %s2419 = scalar_lea.sflag [#allocation7], 1
    %2420 = vsyncpa %s2419, 1
    %2421 = vsyncpa [#allocation10], 1
    %s2422 = scalar_lea.sflag [#allocation10], 1
    %2423 = vsyncpa %s2422, 1
    %2424 = vsyncpa [#allocation5], 1
    %s2425 = scalar_lea.sflag [#allocation5], 1
    %2426 = vsyncpa %s2425, 1

</llo_original>
